<compile_context>
chip_gen: v5e
topology: v5e:2x2
jax: 0.10.0
libtpu: 0.0.40
codegen_flags: <defaults>
</compile_context>

<pallas_src>
import jax
import jax.numpy as jnp
import numpy as np
from jax.experimental import pallas as pl
from jax.experimental.pallas import tpu as pltpu

EPS = 1e-5
N_ENV_HIDDEN = 10                      # extra [Linear(H,H), BN, ReLU] in env_layer
N_CTX_HIDDEN = 5                       # extra [Linear(H,H), BN, ReLU] in context_layer
N_BN = 1 + N_ENV_HIDDEN + 1 + N_CTX_HIDDEN          # 17 BN layers total
N_W = N_ENV_HIDDEN + 2 + N_CTX_HIDDEN                # 17 HxH matmul weights


def _bn_relu_fused(x, gamma, beta):
    """Training-mode BatchNorm1d + ReLU (centered variance, biased estimator)."""
    inv_b = 1.0 / x.shape[0]
    mean = jnp.sum(x, axis=0, keepdims=True) * inv_b
    xc = x - mean
    var = jnp.sum(xc * xc, axis=0, keepdims=True) * inv_b
    scale = gamma * jax.lax.rsqrt(var + EPS)
    return jnp.maximum(xc * scale + beta, 0.0)


def context_layer_kernel(rc_ref, ptr_ref, w_ref, gb_ref, out_ref):
    """
    rc:  [B,1]  f32
    ptr: [B,H]  f32
    w:   [17,H,H] bf16, stored as [in_features, out_features]:
           rows 0..9   env hidden weights
           row  10     wc0[0:H]   (applied to env output)
           row  11     wc0[H:2H]  (applied to gru_hidden_pointer)
           rows 12..16 ctx hidden weights
    gb:  [1+17, 2, H] f32:
           slice 0, row 0 = Linear(1,H) weight (row 1 unused)
           slice 1+j      = (gamma_j, beta_j) for BN layer j
    """
    we0 = gb_ref[0][0:1, :]

    def gamma_beta(j):
        slab = gb_ref[1 + j]            # sublane-aligned (2,H) tile per BN layer
        return slab[0:1, :], slab[1:2, :]

    # ---------------- env_layer ----------------
    # Linear(1,H): [B,1]*[1,H] outer product on the VPU (f32); bias cancels in BN.
    g, b = gamma_beta(0)
    h = _bn_relu_fused(rc_ref[...] * we0, g, b)
    for i in range(N_ENV_HIDDEN):
        z = jnp.dot(h.astype(jnp.bfloat16), w_ref[i],
                    preferred_element_type=jnp.float32)
        g, b = gamma_beta(1 + i)
        h = _bn_relu_fused(z, g, b)

    # ---------------- context_layer ----------------
    # cat([env, ptr], dim=1) @ W  ==  env @ W[:H] + ptr @ W[H:]
    z = (jnp.dot(h.astype(jnp.bfloat16), w_ref[N_ENV_HIDDEN],
                 preferred_element_type=jnp.float32)
         + jnp.dot(ptr_ref[...].astype(jnp.bfloat16), w_ref[N_ENV_HIDDEN + 1],
                   preferred_element_type=jnp.float32))
    g, b = gamma_beta(1 + N_ENV_HIDDEN)
    c = _bn_relu_fused(z, g, b)
    for i in range(N_CTX_HIDDEN):
        z = jnp.dot(c.astype(jnp.bfloat16), w_ref[N_ENV_HIDDEN + 2 + i],
                    preferred_element_type=jnp.float32)
        g, b = gamma_beta(2 + N_ENV_HIDDEN + i)
        c = _bn_relu_fused(z, g, b)

    out_ref[...] = c.astype(out_ref.dtype)


def _pack_params(params, H):
    """Coalesce all parameters into two stacked inputs (2 DMAs)."""
    w_stack = jnp.concatenate(
        [params["we"],                               # (10, H, H)
         params["wc0"][0:H][None],                   # (1, H, H)
         params["wc0"][H:2 * H][None],               # (1, H, H)
         params["wc"]], axis=0).astype(jnp.bfloat16)  # -> (17, H, H) bf16
    gammas = jnp.concatenate(
        [params["ge0"], params["ge"], params["gc0"], params["gc"]], axis=0)
    betas = jnp.concatenate(
        [params["bte0"], params["bte"], params["btc0"], params["btc"]], axis=0)
    gb = jnp.stack([gammas, betas], axis=1)                               # (17,2,H)
    head = jnp.stack([params["we0"], jnp.zeros_like(params["we0"])], axis=1)  # (1,2,H)
    gb_stack = jnp.concatenate([head, gb], axis=0)                        # (18,2,H) f32
    return w_stack, gb_stack


def _vmem_limit_bytes(B, H):
    """Guard for larger H: v5e scoped default is 16 MiB, v7x physical is 64 MiB."""
    lane = max(H, 128)
    sub = ((B + 7) // 8) * 8
    w_bytes = N_W * (((H + 15) // 16) * 16) * lane * 2        # bf16 weights
    gb_bytes = (1 + N_BN) * 8 * lane * 4
    act_bytes = 4 * sub * lane * 4
    need = 2 * (w_bytes + gb_bytes + act_bytes)               # headroom
    return int(min(64 << 20, max(32 << 20, need)))


@jax.jit
def context_layer_forward(remaining_capacity, gru_hidden_pointer, params):
    """remaining_capacity: [B,1] f32, gru_hidden_pointer: [B,H] f32 -> [B,H] f32."""
    B = remaining_capacity.shape[0]
    H = gru_hidden_pointer.shape[1]
    w_stack, gb_stack = _pack_params(params, H)

    vmem = pl.BlockSpec(memory_space=pltpu.MemorySpace.VMEM)
    return pl.pallas_call(
        context_layer_kernel,
        out_shape=jax.ShapeDtypeStruct((B, H), jnp.float32),
        in_specs=[vmem, vmem, vmem, vmem],
        out_specs=vmem,
        compiler_params=pltpu.CompilerParams(
            vmem_limit_bytes=_vmem_limit_bytes(B, H)),
    )(remaining_capacity, gru_hidden_pointer, w_stack, gb_stack)


def init_params(key, H):
    def nrm(k, shape, scale):
        return scale * jax.random.normal(k, shape, jnp.float32)

    keys = iter(jax.random.split(key, 16))
    p = {}
    # env_layer: Linear(1,H)+BN, then 10x Linear(H,H)+BN
    p["we0"] = nrm(next(keys), (1, H), 1.0)
    p["be0"] = nrm(next(keys), (1, H), 0.1)
    p["ge0"] = 1.0 + nrm(next(keys), (1, H), 0.05)
    p["bte0"] = nrm(next(keys), (1, H), 0.05)
    p["we"] = nrm(next(keys), (N_ENV_HIDDEN, H, H), 1.0 / np.sqrt(H))
    p["be"] = nrm(next(keys), (N_ENV_HIDDEN, H), 0.1)
    p["ge"] = 1.0 + nrm(next(keys), (N_ENV_HIDDEN, H), 0.05)
    p["bte"] = nrm(next(keys), (N_ENV_HIDDEN, H), 0.05)
    # context_layer: Linear(2H,H)+BN, then 5x Linear(H,H)+BN
    p["wc0"] = nrm(next(keys), (2 * H, H), 1.0 / np.sqrt(2 * H))
    p["bc0"] = nrm(next(keys), (1, H), 0.1)
    p["gc0"] = 1.0 + nrm(next(keys), (1, H), 0.05)
    p["btc0"] = nrm(next(keys), (1, H), 0.05)
    p["wc"] = nrm(next(keys), (N_CTX_HIDDEN, H, H), 1.0 / np.sqrt(H))
    p["bc"] = nrm(next(keys), (N_CTX_HIDDEN, H), 0.1)
    p["gc"] = 1.0 + nrm(next(keys), (N_CTX_HIDDEN, H), 0.05)
    p["btc"] = nrm(next(keys), (N_CTX_HIDDEN, H), 0.05)
    return p


def reference_forward(rc, ptr, p):
    """Pure-JAX replica of the PyTorch forward (training-mode BN, WITH biases).

    Matmul operands are rounded to bfloat16 exactly as the kernel does (f32
    accumulation, f32 BN), so the comparison isolates structural correctness
    (bias-drop identity, BN stats, weight stacking, concat-as-two-matmuls)
    from the deliberate bf16 MXU-operand choice.
    """
    def mm(x, w):
        return jnp.dot(x.astype(jnp.bfloat16), w.astype(jnp.bfloat16),
                       preferred_element_type=jnp.float32)

    def bn_relu(x, gamma, beta):
        mean = jnp.mean(x, axis=0, keepdims=True)
        var = jnp.mean(jnp.square(x - mean), axis=0, keepdims=True)
        y = (x - mean) * jax.lax.rsqrt(var + EPS)
        return jnp.maximum(y * gamma + beta, 0.0)

    h = rc * p["we0"] + p["be0"]
    h = bn_relu(h, p["ge0"], p["bte0"])
    for i in range(N_ENV_HIDDEN):
        h = bn_relu(mm(h, p["we"][i]) + p["be"][i], p["ge"][i], p["bte"][i])
    cat = jnp.concatenate([h, ptr], axis=1)
    c = bn_relu(mm(cat, p["wc0"]) + p["bc0"], p["gc0"], p["btc0"])
    for i in range(N_CTX_HIDDEN):
        c = bn_relu(mm(c, p["wc"][i]) + p["bc"][i], p["gc"][i], p["btc"][i])
    return c


if __name__ == "__main__":
    B, H = 8, 32
    key = jax.random.PRNGKey(0)
    k_params, k_rc, k_ptr = jax.random.split(key, 3)

    params = init_params(k_params, H)
    remaining_capacity = jax.random.uniform(k_rc, (B, 1), jnp.float32)   # (batch, 1)
    gru_hidden_pointer = jax.random.normal(k_ptr, (B, H), jnp.float32)   # (batch, hidden)

    out = context_layer_forward(remaining_capacity, gru_hidden_pointer, params)
    out = jax.block_until_ready(out)

    ref = reference_forward(remaining_capacity, gru_hidden_pointer, params)
    # Kernel and reference share the bf16 operand rounding, so remaining
    # differences are f32 reduction-order noise; 2e-2 also covers the rare
    # case where that noise flips a bf16/ReLU rounding boundary deep in the
    # 17-layer chain.
    np.testing.assert_allclose(np.asarray(out), np.asarray(ref),
                               rtol=2e-2, atol=2e-2)
    print("KERNEL_OK")
</pallas_src>

<mosaic_0001>
module attributes {stable_mosaic.version = 11 : i64} {
  func.func @context_layer_kernel(%arg0: memref<8x1xf32, #tpu.memory_space<vmem>>, %arg1: memref<8x32xf32, #tpu.memory_space<vmem>>, %arg2: memref<17x32x32xbf16, #tpu.memory_space<vmem>>, %arg3: memref<18x2x32xf32, #tpu.memory_space<vmem>>, %arg4: memref<8x32xf32, #tpu.memory_space<vmem>>) attributes {dimension_semantics = [], scalar_prefetch = 0 : i64, scratch_operands = 0 : i64, tpu.core_type = #tpu.core_type<tc>} {
    %c0 = arith.constant 0 : index
    %c0_0 = arith.constant 0 : index
    %c0_1 = arith.constant 0 : index
    %0 = vector.load %arg3[%c0, %c0_0, %c0_1] : memref<18x2x32xf32, #tpu.memory_space<vmem>>, vector<1x2x32xf32>
    %1 = vector.shape_cast %0 : vector<1x2x32xf32> to vector<2x32xf32>
    %2 = vector.extract_strided_slice %1 {offsets = [0, 0], sizes = [1, 32], strides = [1, 1]} : vector<2x32xf32> to vector<1x32xf32>
    %c1 = arith.constant 1 : index
    %c0_2 = arith.constant 0 : index
    %c0_3 = arith.constant 0 : index
    %3 = vector.load %arg3[%c1, %c0_2, %c0_3] : memref<18x2x32xf32, #tpu.memory_space<vmem>>, vector<1x2x32xf32>
    %4 = vector.shape_cast %3 : vector<1x2x32xf32> to vector<2x32xf32>
    %5 = vector.extract_strided_slice %4 {offsets = [0, 0], sizes = [1, 32], strides = [1, 1]} : vector<2x32xf32> to vector<1x32xf32>
    %6 = vector.extract_strided_slice %4 {offsets = [1, 0], sizes = [1, 32], strides = [1, 1]} : vector<2x32xf32> to vector<1x32xf32>
    %c0_4 = arith.constant 0 : index
    %c0_5 = arith.constant 0 : index
    %7 = vector.load %arg0[%c0_4, %c0_5] : memref<8x1xf32, #tpu.memory_space<vmem>>, vector<8x1xf32>
    %8 = vector.broadcast %7 : vector<8x1xf32> to vector<8x32xf32>
    %9 = vector.broadcast %2 : vector<1x32xf32> to vector<8x32xf32>
    %10 = arith.mulf %8, %9 : vector<8x32xf32>
    %cst = arith.constant dense<0.000000e+00> : vector<32xf32>
    %11 = vector.multi_reduction <add>, %10, %cst [0] : vector<8x32xf32> to vector<32xf32>
    %12 = vector.shape_cast %11 : vector<32xf32> to vector<1x32xf32>
    %cst_6 = arith.constant 1.250000e-01 : f32
    %13 = vector.broadcast %cst_6 : f32 to vector<1x32xf32>
    %14 = arith.mulf %12, %13 : vector<1x32xf32>
    %15 = vector.broadcast %14 : vector<1x32xf32> to vector<8x32xf32>
    %16 = arith.subf %10, %15 : vector<8x32xf32>
    %17 = arith.mulf %16, %16 : vector<8x32xf32>
    %cst_7 = arith.constant dense<0.000000e+00> : vector<32xf32>
    %18 = vector.multi_reduction <add>, %17, %cst_7 [0] : vector<8x32xf32> to vector<32xf32>
    %19 = vector.shape_cast %18 : vector<32xf32> to vector<1x32xf32>
    %cst_8 = arith.constant 1.250000e-01 : f32
    %20 = vector.broadcast %cst_8 : f32 to vector<1x32xf32>
    %21 = arith.mulf %19, %20 : vector<1x32xf32>
    %cst_9 = arith.constant 9.99999974E-6 : f32
    %22 = vector.broadcast %cst_9 : f32 to vector<1x32xf32>
    %23 = arith.addf %21, %22 : vector<1x32xf32>
    %24 = math.rsqrt %23 : vector<1x32xf32>
    %25 = arith.mulf %5, %24 : vector<1x32xf32>
    %26 = vector.broadcast %25 : vector<1x32xf32> to vector<8x32xf32>
    %27 = arith.mulf %16, %26 : vector<8x32xf32>
    %28 = vector.broadcast %6 : vector<1x32xf32> to vector<8x32xf32>
    %29 = arith.addf %27, %28 : vector<8x32xf32>
    %cst_10 = arith.constant 0.000000e+00 : f32
    %30 = vector.broadcast %cst_10 : f32 to vector<8x32xf32>
    %31 = arith.maximumf %29, %30 : vector<8x32xf32>
    %32 = arith.truncf %31 : vector<8x32xf32> to vector<8x32xbf16>
    %c0_11 = arith.constant 0 : index
    %c0_12 = arith.constant 0 : index
    %c0_13 = arith.constant 0 : index
    %33 = vector.load %arg2[%c0_11, %c0_12, %c0_13] : memref<17x32x32xbf16, #tpu.memory_space<vmem>>, vector<1x32x32xbf16>
    %34 = vector.shape_cast %33 : vector<1x32x32xbf16> to vector<32x32xbf16>
    %cst_14 = arith.constant dense<0.000000e+00> : vector<8x32xf32>
    %35 = tpu.matmul %32, %34, %cst_14 {dimension_numbers = #tpu.dot_dimension_numbers<[1], [0], [0], [1], [0, 0, 1, 1], [], []>} : vector<8x32xbf16>, vector<32x32xbf16>, vector<8x32xf32> -> vector<8x32xf32>
    %c2 = arith.constant 2 : index
    %c0_15 = arith.constant 0 : index
    %c0_16 = arith.constant 0 : index
    %36 = vector.load %arg3[%c2, %c0_15, %c0_16] : memref<18x2x32xf32, #tpu.memory_space<vmem>>, vector<1x2x32xf32>
    %37 = vector.shape_cast %36 : vector<1x2x32xf32> to vector<2x32xf32>
    %38 = vector.extract_strided_slice %37 {offsets = [0, 0], sizes = [1, 32], strides = [1, 1]} : vector<2x32xf32> to vector<1x32xf32>
    %39 = vector.extract_strided_slice %37 {offsets = [1, 0], sizes = [1, 32], strides = [1, 1]} : vector<2x32xf32> to vector<1x32xf32>
    %cst_17 = arith.constant dense<0.000000e+00> : vector<32xf32>
    %40 = vector.multi_reduction <add>, %35, %cst_17 [0] : vector<8x32xf32> to vector<32xf32>
    %41 = vector.shape_cast %40 : vector<32xf32> to vector<1x32xf32>
    %cst_18 = arith.constant 1.250000e-01 : f32
    %42 = vector.broadcast %cst_18 : f32 to vector<1x32xf32>
    %43 = arith.mulf %41, %42 : vector<1x32xf32>
    %44 = vector.broadcast %43 : vector<1x32xf32> to vector<8x32xf32>
    %45 = arith.subf %35, %44 : vector<8x32xf32>
    %46 = arith.mulf %45, %45 : vector<8x32xf32>
    %cst_19 = arith.constant dense<0.000000e+00> : vector<32xf32>
    %47 = vector.multi_reduction <add>, %46, %cst_19 [0] : vector<8x32xf32> to vector<32xf32>
    %48 = vector.shape_cast %47 : vector<32xf32> to vector<1x32xf32>
    %cst_20 = arith.constant 1.250000e-01 : f32
    %49 = vector.broadcast %cst_20 : f32 to vector<1x32xf32>
    %50 = arith.mulf %48, %49 : vector<1x32xf32>
    %cst_21 = arith.constant 9.99999974E-6 : f32
    %51 = vector.broadcast %cst_21 : f32 to vector<1x32xf32>
    %52 = arith.addf %50, %51 : vector<1x32xf32>
    %53 = math.rsqrt %52 : vector<1x32xf32>
    %54 = arith.mulf %38, %53 : vector<1x32xf32>
    %55 = vector.broadcast %54 : vector<1x32xf32> to vector<8x32xf32>
    %56 = arith.mulf %45, %55 : vector<8x32xf32>
    %57 = vector.broadcast %39 : vector<1x32xf32> to vector<8x32xf32>
    %58 = arith.addf %56, %57 : vector<8x32xf32>
    %cst_22 = arith.constant 0.000000e+00 : f32
    %59 = vector.broadcast %cst_22 : f32 to vector<8x32xf32>
    %60 = arith.maximumf %58, %59 : vector<8x32xf32>
    %61 = arith.truncf %60 : vector<8x32xf32> to vector<8x32xbf16>
    %c1_23 = arith.constant 1 : index
    %c0_24 = arith.constant 0 : index
    %c0_25 = arith.constant 0 : index
    %62 = vector.load %arg2[%c1_23, %c0_24, %c0_25] : memref<17x32x32xbf16, #tpu.memory_space<vmem>>, vector<1x32x32xbf16>
    %63 = vector.shape_cast %62 : vector<1x32x32xbf16> to vector<32x32xbf16>
    %cst_26 = arith.constant dense<0.000000e+00> : vector<8x32xf32>
    %64 = tpu.matmul %61, %63, %cst_26 {dimension_numbers = #tpu.dot_dimension_numbers<[1], [0], [0], [1], [0, 0, 1, 1], [], []>} : vector<8x32xbf16>, vector<32x32xbf16>, vector<8x32xf32> -> vector<8x32xf32>
    %c3 = arith.constant 3 : index
    %c0_27 = arith.constant 0 : index
    %c0_28 = arith.constant 0 : index
    %65 = vector.load %arg3[%c3, %c0_27, %c0_28] : memref<18x2x32xf32, #tpu.memory_space<vmem>>, vector<1x2x32xf32>
    %66 = vector.shape_cast %65 : vector<1x2x32xf32> to vector<2x32xf32>
    %67 = vector.extract_strided_slice %66 {offsets = [0, 0], sizes = [1, 32], strides = [1, 1]} : vector<2x32xf32> to vector<1x32xf32>
    %68 = vector.extract_strided_slice %66 {offsets = [1, 0], sizes = [1, 32], strides = [1, 1]} : vector<2x32xf32> to vector<1x32xf32>
    %cst_29 = arith.constant dense<0.000000e+00> : vector<32xf32>
    %69 = vector.multi_reduction <add>, %64, %cst_29 [0] : vector<8x32xf32> to vector<32xf32>
    %70 = vector.shape_cast %69 : vector<32xf32> to vector<1x32xf32>
    %cst_30 = arith.constant 1.250000e-01 : f32
    %71 = vector.broadcast %cst_30 : f32 to vector<1x32xf32>
    %72 = arith.mulf %70, %71 : vector<1x32xf32>
    %73 = vector.broadcast %72 : vector<1x32xf32> to vector<8x32xf32>
    %74 = arith.subf %64, %73 : vector<8x32xf32>
    %75 = arith.mulf %74, %74 : vector<8x32xf32>
    %cst_31 = arith.constant dense<0.000000e+00> : vector<32xf32>
    %76 = vector.multi_reduction <add>, %75, %cst_31 [0] : vector<8x32xf32> to vector<32xf32>
    %77 = vector.shape_cast %76 : vector<32xf32> to vector<1x32xf32>
    %cst_32 = arith.constant 1.250000e-01 : f32
    %78 = vector.broadcast %cst_32 : f32 to vector<1x32xf32>
    %79 = arith.mulf %77, %78 : vector<1x32xf32>
    %cst_33 = arith.constant 9.99999974E-6 : f32
    %80 = vector.broadcast %cst_33 : f32 to vector<1x32xf32>
    %81 = arith.addf %79, %80 : vector<1x32xf32>
    %82 = math.rsqrt %81 : vector<1x32xf32>
    %83 = arith.mulf %67, %82 : vector<1x32xf32>
    %84 = vector.broadcast %83 : vector<1x32xf32> to vector<8x32xf32>
    %85 = arith.mulf %74, %84 : vector<8x32xf32>
    %86 = vector.broadcast %68 : vector<1x32xf32> to vector<8x32xf32>
    %87 = arith.addf %85, %86 : vector<8x32xf32>
    %cst_34 = arith.constant 0.000000e+00 : f32
    %88 = vector.broadcast %cst_34 : f32 to vector<8x32xf32>
    %89 = arith.maximumf %87, %88 : vector<8x32xf32>
    %90 = arith.truncf %89 : vector<8x32xf32> to vector<8x32xbf16>
    %c2_35 = arith.constant 2 : index
    %c0_36 = arith.constant 0 : index
    %c0_37 = arith.constant 0 : index
    %91 = vector.load %arg2[%c2_35, %c0_36, %c0_37] : memref<17x32x32xbf16, #tpu.memory_space<vmem>>, vector<1x32x32xbf16>
    %92 = vector.shape_cast %91 : vector<1x32x32xbf16> to vector<32x32xbf16>
    %cst_38 = arith.constant dense<0.000000e+00> : vector<8x32xf32>
    %93 = tpu.matmul %90, %92, %cst_38 {dimension_numbers = #tpu.dot_dimension_numbers<[1], [0], [0], [1], [0, 0, 1, 1], [], []>} : vector<8x32xbf16>, vector<32x32xbf16>, vector<8x32xf32> -> vector<8x32xf32>
    %c4 = arith.constant 4 : index
    %c0_39 = arith.constant 0 : index
    %c0_40 = arith.constant 0 : index
    %94 = vector.load %arg3[%c4, %c0_39, %c0_40] : memref<18x2x32xf32, #tpu.memory_space<vmem>>, vector<1x2x32xf32>
    %95 = vector.shape_cast %94 : vector<1x2x32xf32> to vector<2x32xf32>
    %96 = vector.extract_strided_slice %95 {offsets = [0, 0], sizes = [1, 32], strides = [1, 1]} : vector<2x32xf32> to vector<1x32xf32>
    %97 = vector.extract_strided_slice %95 {offsets = [1, 0], sizes = [1, 32], strides = [1, 1]} : vector<2x32xf32> to vector<1x32xf32>
    %cst_41 = arith.constant dense<0.000000e+00> : vector<32xf32>
    %98 = vector.multi_reduction <add>, %93, %cst_41 [0] : vector<8x32xf32> to vector<32xf32>
    %99 = vector.shape_cast %98 : vector<32xf32> to vector<1x32xf32>
    %cst_42 = arith.constant 1.250000e-01 : f32
    %100 = vector.broadcast %cst_42 : f32 to vector<1x32xf32>
    %101 = arith.mulf %99, %100 : vector<1x32xf32>
    %102 = vector.broadcast %101 : vector<1x32xf32> to vector<8x32xf32>
    %103 = arith.subf %93, %102 : vector<8x32xf32>
    %104 = arith.mulf %103, %103 : vector<8x32xf32>
    %cst_43 = arith.constant dense<0.000000e+00> : vector<32xf32>
    %105 = vector.multi_reduction <add>, %104, %cst_43 [0] : vector<8x32xf32> to vector<32xf32>
    %106 = vector.shape_cast %105 : vector<32xf32> to vector<1x32xf32>
    %cst_44 = arith.constant 1.250000e-01 : f32
    %107 = vector.broadcast %cst_44 : f32 to vector<1x32xf32>
    %108 = arith.mulf %106, %107 : vector<1x32xf32>
    %cst_45 = arith.constant 9.99999974E-6 : f32
    %109 = vector.broadcast %cst_45 : f32 to vector<1x32xf32>
    %110 = arith.addf %108, %109 : vector<1x32xf32>
    %111 = math.rsqrt %110 : vector<1x32xf32>
    %112 = arith.mulf %96, %111 : vector<1x32xf32>
    %113 = vector.broadcast %112 : vector<1x32xf32> to vector<8x32xf32>
    %114 = arith.mulf %103, %113 : vector<8x32xf32>
    %115 = vector.broadcast %97 : vector<1x32xf32> to vector<8x32xf32>
    %116 = arith.addf %114, %115 : vector<8x32xf32>
    %cst_46 = arith.constant 0.000000e+00 : f32
    %117 = vector.broadcast %cst_46 : f32 to vector<8x32xf32>
    %118 = arith.maximumf %116, %117 : vector<8x32xf32>
    %119 = arith.truncf %118 : vector<8x32xf32> to vector<8x32xbf16>
    %c3_47 = arith.constant 3 : index
    %c0_48 = arith.constant 0 : index
    %c0_49 = arith.constant 0 : index
    %120 = vector.load %arg2[%c3_47, %c0_48, %c0_49] : memref<17x32x32xbf16, #tpu.memory_space<vmem>>, vector<1x32x32xbf16>
    %121 = vector.shape_cast %120 : vector<1x32x32xbf16> to vector<32x32xbf16>
    %cst_50 = arith.constant dense<0.000000e+00> : vector<8x32xf32>
    %122 = tpu.matmul %119, %121, %cst_50 {dimension_numbers = #tpu.dot_dimension_numbers<[1], [0], [0], [1], [0, 0, 1, 1], [], []>} : vector<8x32xbf16>, vector<32x32xbf16>, vector<8x32xf32> -> vector<8x32xf32>
    %c5 = arith.constant 5 : index
    %c0_51 = arith.constant 0 : index
    %c0_52 = arith.constant 0 : index
    %123 = vector.load %arg3[%c5, %c0_51, %c0_52] : memref<18x2x32xf32, #tpu.memory_space<vmem>>, vector<1x2x32xf32>
    %124 = vector.shape_cast %123 : vector<1x2x32xf32> to vector<2x32xf32>
    %125 = vector.extract_strided_slice %124 {offsets = [0, 0], sizes = [1, 32], strides = [1, 1]} : vector<2x32xf32> to vector<1x32xf32>
    %126 = vector.extract_strided_slice %124 {offsets = [1, 0], sizes = [1, 32], strides = [1, 1]} : vector<2x32xf32> to vector<1x32xf32>
    %cst_53 = arith.constant dense<0.000000e+00> : vector<32xf32>
    %127 = vector.multi_reduction <add>, %122, %cst_53 [0] : vector<8x32xf32> to vector<32xf32>
    %128 = vector.shape_cast %127 : vector<32xf32> to vector<1x32xf32>
    %cst_54 = arith.constant 1.250000e-01 : f32
    %129 = vector.broadcast %cst_54 : f32 to vector<1x32xf32>
    %130 = arith.mulf %128, %129 : vector<1x32xf32>
    %131 = vector.broadcast %130 : vector<1x32xf32> to vector<8x32xf32>
    %132 = arith.subf %122, %131 : vector<8x32xf32>
    %133 = arith.mulf %132, %132 : vector<8x32xf32>
    %cst_55 = arith.constant dense<0.000000e+00> : vector<32xf32>
    %134 = vector.multi_reduction <add>, %133, %cst_55 [0] : vector<8x32xf32> to vector<32xf32>
    %135 = vector.shape_cast %134 : vector<32xf32> to vector<1x32xf32>
    %cst_56 = arith.constant 1.250000e-01 : f32
    %136 = vector.broadcast %cst_56 : f32 to vector<1x32xf32>
    %137 = arith.mulf %135, %136 : vector<1x32xf32>
    %cst_57 = arith.constant 9.99999974E-6 : f32
    %138 = vector.broadcast %cst_57 : f32 to vector<1x32xf32>
    %139 = arith.addf %137, %138 : vector<1x32xf32>
    %140 = math.rsqrt %139 : vector<1x32xf32>
    %141 = arith.mulf %125, %140 : vector<1x32xf32>
    %142 = vector.broadcast %141 : vector<1x32xf32> to vector<8x32xf32>
    %143 = arith.mulf %132, %142 : vector<8x32xf32>
    %144 = vector.broadcast %126 : vector<1x32xf32> to vector<8x32xf32>
    %145 = arith.addf %143, %144 : vector<8x32xf32>
    %cst_58 = arith.constant 0.000000e+00 : f32
    %146 = vector.broadcast %cst_58 : f32 to vector<8x32xf32>
    %147 = arith.maximumf %145, %146 : vector<8x32xf32>
    %148 = arith.truncf %147 : vector<8x32xf32> to vector<8x32xbf16>
    %c4_59 = arith.constant 4 : index
    %c0_60 = arith.constant 0 : index
    %c0_61 = arith.constant 0 : index
    %149 = vector.load %arg2[%c4_59, %c0_60, %c0_61] : memref<17x32x32xbf16, #tpu.memory_space<vmem>>, vector<1x32x32xbf16>
    %150 = vector.shape_cast %149 : vector<1x32x32xbf16> to vector<32x32xbf16>
    %cst_62 = arith.constant dense<0.000000e+00> : vector<8x32xf32>
    %151 = tpu.matmul %148, %150, %cst_62 {dimension_numbers = #tpu.dot_dimension_numbers<[1], [0], [0], [1], [0, 0, 1, 1], [], []>} : vector<8x32xbf16>, vector<32x32xbf16>, vector<8x32xf32> -> vector<8x32xf32>
    %c6 = arith.constant 6 : index
    %c0_63 = arith.constant 0 : index
    %c0_64 = arith.constant 0 : index
    %152 = vector.load %arg3[%c6, %c0_63, %c0_64] : memref<18x2x32xf32, #tpu.memory_space<vmem>>, vector<1x2x32xf32>
    %153 = vector.shape_cast %152 : vector<1x2x32xf32> to vector<2x32xf32>
    %154 = vector.extract_strided_slice %153 {offsets = [0, 0], sizes = [1, 32], strides = [1, 1]} : vector<2x32xf32> to vector<1x32xf32>
    %155 = vector.extract_strided_slice %153 {offsets = [1, 0], sizes = [1, 32], strides = [1, 1]} : vector<2x32xf32> to vector<1x32xf32>
    %cst_65 = arith.constant dense<0.000000e+00> : vector<32xf32>
    %156 = vector.multi_reduction <add>, %151, %cst_65 [0] : vector<8x32xf32> to vector<32xf32>
    %157 = vector.shape_cast %156 : vector<32xf32> to vector<1x32xf32>
    %cst_66 = arith.constant 1.250000e-01 : f32
    %158 = vector.broadcast %cst_66 : f32 to vector<1x32xf32>
    %159 = arith.mulf %157, %158 : vector<1x32xf32>
    %160 = vector.broadcast %159 : vector<1x32xf32> to vector<8x32xf32>
    %161 = arith.subf %151, %160 : vector<8x32xf32>
    %162 = arith.mulf %161, %161 : vector<8x32xf32>
    %cst_67 = arith.constant dense<0.000000e+00> : vector<32xf32>
    %163 = vector.multi_reduction <add>, %162, %cst_67 [0] : vector<8x32xf32> to vector<32xf32>
    %164 = vector.shape_cast %163 : vector<32xf32> to vector<1x32xf32>
    %cst_68 = arith.constant 1.250000e-01 : f32
    %165 = vector.broadcast %cst_68 : f32 to vector<1x32xf32>
    %166 = arith.mulf %164, %165 : vector<1x32xf32>
    %cst_69 = arith.constant 9.99999974E-6 : f32
    %167 = vector.broadcast %cst_69 : f32 to vector<1x32xf32>
    %168 = arith.addf %166, %167 : vector<1x32xf32>
    %169 = math.rsqrt %168 : vector<1x32xf32>
    %170 = arith.mulf %154, %169 : vector<1x32xf32>
    %171 = vector.broadcast %170 : vector<1x32xf32> to vector<8x32xf32>
    %172 = arith.mulf %161, %171 : vector<8x32xf32>
    %173 = vector.broadcast %155 : vector<1x32xf32> to vector<8x32xf32>
    %174 = arith.addf %172, %173 : vector<8x32xf32>
    %cst_70 = arith.constant 0.000000e+00 : f32
    %175 = vector.broadcast %cst_70 : f32 to vector<8x32xf32>
    %176 = arith.maximumf %174, %175 : vector<8x32xf32>
    %177 = arith.truncf %176 : vector<8x32xf32> to vector<8x32xbf16>
    %c5_71 = arith.constant 5 : index
    %c0_72 = arith.constant 0 : index
    %c0_73 = arith.constant 0 : index
    %178 = vector.load %arg2[%c5_71, %c0_72, %c0_73] : memref<17x32x32xbf16, #tpu.memory_space<vmem>>, vector<1x32x32xbf16>
    %179 = vector.shape_cast %178 : vector<1x32x32xbf16> to vector<32x32xbf16>
    %cst_74 = arith.constant dense<0.000000e+00> : vector<8x32xf32>
    %180 = tpu.matmul %177, %179, %cst_74 {dimension_numbers = #tpu.dot_dimension_numbers<[1], [0], [0], [1], [0, 0, 1, 1], [], []>} : vector<8x32xbf16>, vector<32x32xbf16>, vector<8x32xf32> -> vector<8x32xf32>
    %c7 = arith.constant 7 : index
    %c0_75 = arith.constant 0 : index
    %c0_76 = arith.constant 0 : index
    %181 = vector.load %arg3[%c7, %c0_75, %c0_76] : memref<18x2x32xf32, #tpu.memory_space<vmem>>, vector<1x2x32xf32>
    %182 = vector.shape_cast %181 : vector<1x2x32xf32> to vector<2x32xf32>
    %183 = vector.extract_strided_slice %182 {offsets = [0, 0], sizes = [1, 32], strides = [1, 1]} : vector<2x32xf32> to vector<1x32xf32>
    %184 = vector.extract_strided_slice %182 {offsets = [1, 0], sizes = [1, 32], strides = [1, 1]} : vector<2x32xf32> to vector<1x32xf32>
    %cst_77 = arith.constant dense<0.000000e+00> : vector<32xf32>
    %185 = vector.multi_reduction <add>, %180, %cst_77 [0] : vector<8x32xf32> to vector<32xf32>
    %186 = vector.shape_cast %185 : vector<32xf32> to vector<1x32xf32>
    %cst_78 = arith.constant 1.250000e-01 : f32
    %187 = vector.broadcast %cst_78 : f32 to vector<1x32xf32>
    %188 = arith.mulf %186, %187 : vector<1x32xf32>
    %189 = vector.broadcast %188 : vector<1x32xf32> to vector<8x32xf32>
    %190 = arith.subf %180, %189 : vector<8x32xf32>
    %191 = arith.mulf %190, %190 : vector<8x32xf32>
    %cst_79 = arith.constant dense<0.000000e+00> : vector<32xf32>
    %192 = vector.multi_reduction <add>, %191, %cst_79 [0] : vector<8x32xf32> to vector<32xf32>
    %193 = vector.shape_cast %192 : vector<32xf32> to vector<1x32xf32>
    %cst_80 = arith.constant 1.250000e-01 : f32
    %194 = vector.broadcast %cst_80 : f32 to vector<1x32xf32>
    %195 = arith.mulf %193, %194 : vector<1x32xf32>
    %cst_81 = arith.constant 9.99999974E-6 : f32
    %196 = vector.broadcast %cst_81 : f32 to vector<1x32xf32>
    %197 = arith.addf %195, %196 : vector<1x32xf32>
    %198 = math.rsqrt %197 : vector<1x32xf32>
    %199 = arith.mulf %183, %198 : vector<1x32xf32>
    %200 = vector.broadcast %199 : vector<1x32xf32> to vector<8x32xf32>
    %201 = arith.mulf %190, %200 : vector<8x32xf32>
    %202 = vector.broadcast %184 : vector<1x32xf32> to vector<8x32xf32>
    %203 = arith.addf %201, %202 : vector<8x32xf32>
    %cst_82 = arith.constant 0.000000e+00 : f32
    %204 = vector.broadcast %cst_82 : f32 to vector<8x32xf32>
    %205 = arith.maximumf %203, %204 : vector<8x32xf32>
    %206 = arith.truncf %205 : vector<8x32xf32> to vector<8x32xbf16>
    %c6_83 = arith.constant 6 : index
    %c0_84 = arith.constant 0 : index
    %c0_85 = arith.constant 0 : index
    %207 = vector.load %arg2[%c6_83, %c0_84, %c0_85] : memref<17x32x32xbf16, #tpu.memory_space<vmem>>, vector<1x32x32xbf16>
    %208 = vector.shape_cast %207 : vector<1x32x32xbf16> to vector<32x32xbf16>
    %cst_86 = arith.constant dense<0.000000e+00> : vector<8x32xf32>
    %209 = tpu.matmul %206, %208, %cst_86 {dimension_numbers = #tpu.dot_dimension_numbers<[1], [0], [0], [1], [0, 0, 1, 1], [], []>} : vector<8x32xbf16>, vector<32x32xbf16>, vector<8x32xf32> -> vector<8x32xf32>
    %c8 = arith.constant 8 : index
    %c0_87 = arith.constant 0 : index
    %c0_88 = arith.constant 0 : index
    %210 = vector.load %arg3[%c8, %c0_87, %c0_88] : memref<18x2x32xf32, #tpu.memory_space<vmem>>, vector<1x2x32xf32>
    %211 = vector.shape_cast %210 : vector<1x2x32xf32> to vector<2x32xf32>
    %212 = vector.extract_strided_slice %211 {offsets = [0, 0], sizes = [1, 32], strides = [1, 1]} : vector<2x32xf32> to vector<1x32xf32>
    %213 = vector.extract_strided_slice %211 {offsets = [1, 0], sizes = [1, 32], strides = [1, 1]} : vector<2x32xf32> to vector<1x32xf32>
    %cst_89 = arith.constant dense<0.000000e+00> : vector<32xf32>
    %214 = vector.multi_reduction <add>, %209, %cst_89 [0] : vector<8x32xf32> to vector<32xf32>
    %215 = vector.shape_cast %214 : vector<32xf32> to vector<1x32xf32>
    %cst_90 = arith.constant 1.250000e-01 : f32
    %216 = vector.broadcast %cst_90 : f32 to vector<1x32xf32>
    %217 = arith.mulf %215, %216 : vector<1x32xf32>
    %218 = vector.broadcast %217 : vector<1x32xf32> to vector<8x32xf32>
    %219 = arith.subf %209, %218 : vector<8x32xf32>
    %220 = arith.mulf %219, %219 : vector<8x32xf32>
    %cst_91 = arith.constant dense<0.000000e+00> : vector<32xf32>
    %221 = vector.multi_reduction <add>, %220, %cst_91 [0] : vector<8x32xf32> to vector<32xf32>
    %222 = vector.shape_cast %221 : vector<32xf32> to vector<1x32xf32>
    %cst_92 = arith.constant 1.250000e-01 : f32
    %223 = vector.broadcast %cst_92 : f32 to vector<1x32xf32>
    %224 = arith.mulf %222, %223 : vector<1x32xf32>
    %cst_93 = arith.constant 9.99999974E-6 : f32
    %225 = vector.broadcast %cst_93 : f32 to vector<1x32xf32>
    %226 = arith.addf %224, %225 : vector<1x32xf32>
    %227 = math.rsqrt %226 : vector<1x32xf32>
    %228 = arith.mulf %212, %227 : vector<1x32xf32>
    %229 = vector.broadcast %228 : vector<1x32xf32> to vector<8x32xf32>
    %230 = arith.mulf %219, %229 : vector<8x32xf32>
    %231 = vector.broadcast %213 : vector<1x32xf32> to vector<8x32xf32>
    %232 = arith.addf %230, %231 : vector<8x32xf32>
    %cst_94 = arith.constant 0.000000e+00 : f32
    %233 = vector.broadcast %cst_94 : f32 to vector<8x32xf32>
    %234 = arith.maximumf %232, %233 : vector<8x32xf32>
    %235 = arith.truncf %234 : vector<8x32xf32> to vector<8x32xbf16>
    %c7_95 = arith.constant 7 : index
    %c0_96 = arith.constant 0 : index
    %c0_97 = arith.constant 0 : index
    %236 = vector.load %arg2[%c7_95, %c0_96, %c0_97] : memref<17x32x32xbf16, #tpu.memory_space<vmem>>, vector<1x32x32xbf16>
    %237 = vector.shape_cast %236 : vector<1x32x32xbf16> to vector<32x32xbf16>
    %cst_98 = arith.constant dense<0.000000e+00> : vector<8x32xf32>
    %238 = tpu.matmul %235, %237, %cst_98 {dimension_numbers = #tpu.dot_dimension_numbers<[1], [0], [0], [1], [0, 0, 1, 1], [], []>} : vector<8x32xbf16>, vector<32x32xbf16>, vector<8x32xf32> -> vector<8x32xf32>
    %c9 = arith.constant 9 : index
    %c0_99 = arith.constant 0 : index
    %c0_100 = arith.constant 0 : index
    %239 = vector.load %arg3[%c9, %c0_99, %c0_100] : memref<18x2x32xf32, #tpu.memory_space<vmem>>, vector<1x2x32xf32>
    %240 = vector.shape_cast %239 : vector<1x2x32xf32> to vector<2x32xf32>
    %241 = vector.extract_strided_slice %240 {offsets = [0, 0], sizes = [1, 32], strides = [1, 1]} : vector<2x32xf32> to vector<1x32xf32>
    %242 = vector.extract_strided_slice %240 {offsets = [1, 0], sizes = [1, 32], strides = [1, 1]} : vector<2x32xf32> to vector<1x32xf32>
    %cst_101 = arith.constant dense<0.000000e+00> : vector<32xf32>
    %243 = vector.multi_reduction <add>, %238, %cst_101 [0] : vector<8x32xf32> to vector<32xf32>
    %244 = vector.shape_cast %243 : vector<32xf32> to vector<1x32xf32>
    %cst_102 = arith.constant 1.250000e-01 : f32
    %245 = vector.broadcast %cst_102 : f32 to vector<1x32xf32>
    %246 = arith.mulf %244, %245 : vector<1x32xf32>
    %247 = vector.broadcast %246 : vector<1x32xf32> to vector<8x32xf32>
    %248 = arith.subf %238, %247 : vector<8x32xf32>
    %249 = arith.mulf %248, %248 : vector<8x32xf32>
    %cst_103 = arith.constant dense<0.000000e+00> : vector<32xf32>
    %250 = vector.multi_reduction <add>, %249, %cst_103 [0] : vector<8x32xf32> to vector<32xf32>
    %251 = vector.shape_cast %250 : vector<32xf32> to vector<1x32xf32>
    %cst_104 = arith.constant 1.250000e-01 : f32
    %252 = vector.broadcast %cst_104 : f32 to vector<1x32xf32>
    %253 = arith.mulf %251, %252 : vector<1x32xf32>
    %cst_105 = arith.constant 9.99999974E-6 : f32
    %254 = vector.broadcast %cst_105 : f32 to vector<1x32xf32>
    %255 = arith.addf %253, %254 : vector<1x32xf32>
    %256 = math.rsqrt %255 : vector<1x32xf32>
    %257 = arith.mulf %241, %256 : vector<1x32xf32>
    %258 = vector.broadcast %257 : vector<1x32xf32> to vector<8x32xf32>
    %259 = arith.mulf %248, %258 : vector<8x32xf32>
    %260 = vector.broadcast %242 : vector<1x32xf32> to vector<8x32xf32>
    %261 = arith.addf %259, %260 : vector<8x32xf32>
    %cst_106 = arith.constant 0.000000e+00 : f32
    %262 = vector.broadcast %cst_106 : f32 to vector<8x32xf32>
    %263 = arith.maximumf %261, %262 : vector<8x32xf32>
    %264 = arith.truncf %263 : vector<8x32xf32> to vector<8x32xbf16>
    %c8_107 = arith.constant 8 : index
    %c0_108 = arith.constant 0 : index
    %c0_109 = arith.constant 0 : index
    %265 = vector.load %arg2[%c8_107, %c0_108, %c0_109] : memref<17x32x32xbf16, #tpu.memory_space<vmem>>, vector<1x32x32xbf16>
    %266 = vector.shape_cast %265 : vector<1x32x32xbf16> to vector<32x32xbf16>
    %cst_110 = arith.constant dense<0.000000e+00> : vector<8x32xf32>
    %267 = tpu.matmul %264, %266, %cst_110 {dimension_numbers = #tpu.dot_dimension_numbers<[1], [0], [0], [1], [0, 0, 1, 1], [], []>} : vector<8x32xbf16>, vector<32x32xbf16>, vector<8x32xf32> -> vector<8x32xf32>
    %c10 = arith.constant 10 : index
    %c0_111 = arith.constant 0 : index
    %c0_112 = arith.constant 0 : index
    %268 = vector.load %arg3[%c10, %c0_111, %c0_112] : memref<18x2x32xf32, #tpu.memory_space<vmem>>, vector<1x2x32xf32>
    %269 = vector.shape_cast %268 : vector<1x2x32xf32> to vector<2x32xf32>
    %270 = vector.extract_strided_slice %269 {offsets = [0, 0], sizes = [1, 32], strides = [1, 1]} : vector<2x32xf32> to vector<1x32xf32>
    %271 = vector.extract_strided_slice %269 {offsets = [1, 0], sizes = [1, 32], strides = [1, 1]} : vector<2x32xf32> to vector<1x32xf32>
    %cst_113 = arith.constant dense<0.000000e+00> : vector<32xf32>
    %272 = vector.multi_reduction <add>, %267, %cst_113 [0] : vector<8x32xf32> to vector<32xf32>
    %273 = vector.shape_cast %272 : vector<32xf32> to vector<1x32xf32>
    %cst_114 = arith.constant 1.250000e-01 : f32
    %274 = vector.broadcast %cst_114 : f32 to vector<1x32xf32>
    %275 = arith.mulf %273, %274 : vector<1x32xf32>
    %276 = vector.broadcast %275 : vector<1x32xf32> to vector<8x32xf32>
    %277 = arith.subf %267, %276 : vector<8x32xf32>
    %278 = arith.mulf %277, %277 : vector<8x32xf32>
    %cst_115 = arith.constant dense<0.000000e+00> : vector<32xf32>
    %279 = vector.multi_reduction <add>, %278, %cst_115 [0] : vector<8x32xf32> to vector<32xf32>
    %280 = vector.shape_cast %279 : vector<32xf32> to vector<1x32xf32>
    %cst_116 = arith.constant 1.250000e-01 : f32
    %281 = vector.broadcast %cst_116 : f32 to vector<1x32xf32>
    %282 = arith.mulf %280, %281 : vector<1x32xf32>
    %cst_117 = arith.constant 9.99999974E-6 : f32
    %283 = vector.broadcast %cst_117 : f32 to vector<1x32xf32>
    %284 = arith.addf %282, %283 : vector<1x32xf32>
    %285 = math.rsqrt %284 : vector<1x32xf32>
    %286 = arith.mulf %270, %285 : vector<1x32xf32>
    %287 = vector.broadcast %286 : vector<1x32xf32> to vector<8x32xf32>
    %288 = arith.mulf %277, %287 : vector<8x32xf32>
    %289 = vector.broadcast %271 : vector<1x32xf32> to vector<8x32xf32>
    %290 = arith.addf %288, %289 : vector<8x32xf32>
    %cst_118 = arith.constant 0.000000e+00 : f32
    %291 = vector.broadcast %cst_118 : f32 to vector<8x32xf32>
    %292 = arith.maximumf %290, %291 : vector<8x32xf32>
    %293 = arith.truncf %292 : vector<8x32xf32> to vector<8x32xbf16>
    %c9_119 = arith.constant 9 : index
    %c0_120 = arith.constant 0 : index
    %c0_121 = arith.constant 0 : index
    %294 = vector.load %arg2[%c9_119, %c0_120, %c0_121] : memref<17x32x32xbf16, #tpu.memory_space<vmem>>, vector<1x32x32xbf16>
    %295 = vector.shape_cast %294 : vector<1x32x32xbf16> to vector<32x32xbf16>
    %cst_122 = arith.constant dense<0.000000e+00> : vector<8x32xf32>
    %296 = tpu.matmul %293, %295, %cst_122 {dimension_numbers = #tpu.dot_dimension_numbers<[1], [0], [0], [1], [0, 0, 1, 1], [], []>} : vector<8x32xbf16>, vector<32x32xbf16>, vector<8x32xf32> -> vector<8x32xf32>
    %c11 = arith.constant 11 : index
    %c0_123 = arith.constant 0 : index
    %c0_124 = arith.constant 0 : index
    %297 = vector.load %arg3[%c11, %c0_123, %c0_124] : memref<18x2x32xf32, #tpu.memory_space<vmem>>, vector<1x2x32xf32>
    %298 = vector.shape_cast %297 : vector<1x2x32xf32> to vector<2x32xf32>
    %299 = vector.extract_strided_slice %298 {offsets = [0, 0], sizes = [1, 32], strides = [1, 1]} : vector<2x32xf32> to vector<1x32xf32>
    %300 = vector.extract_strided_slice %298 {offsets = [1, 0], sizes = [1, 32], strides = [1, 1]} : vector<2x32xf32> to vector<1x32xf32>
    %cst_125 = arith.constant dense<0.000000e+00> : vector<32xf32>
    %301 = vector.multi_reduction <add>, %296, %cst_125 [0] : vector<8x32xf32> to vector<32xf32>
    %302 = vector.shape_cast %301 : vector<32xf32> to vector<1x32xf32>
    %cst_126 = arith.constant 1.250000e-01 : f32
    %303 = vector.broadcast %cst_126 : f32 to vector<1x32xf32>
    %304 = arith.mulf %302, %303 : vector<1x32xf32>
    %305 = vector.broadcast %304 : vector<1x32xf32> to vector<8x32xf32>
    %306 = arith.subf %296, %305 : vector<8x32xf32>
    %307 = arith.mulf %306, %306 : vector<8x32xf32>
    %cst_127 = arith.constant dense<0.000000e+00> : vector<32xf32>
    %308 = vector.multi_reduction <add>, %307, %cst_127 [0] : vector<8x32xf32> to vector<32xf32>
    %309 = vector.shape_cast %308 : vector<32xf32> to vector<1x32xf32>
    %cst_128 = arith.constant 1.250000e-01 : f32
    %310 = vector.broadcast %cst_128 : f32 to vector<1x32xf32>
    %311 = arith.mulf %309, %310 : vector<1x32xf32>
    %cst_129 = arith.constant 9.99999974E-6 : f32
    %312 = vector.broadcast %cst_129 : f32 to vector<1x32xf32>
    %313 = arith.addf %311, %312 : vector<1x32xf32>
    %314 = math.rsqrt %313 : vector<1x32xf32>
    %315 = arith.mulf %299, %314 : vector<1x32xf32>
    %316 = vector.broadcast %315 : vector<1x32xf32> to vector<8x32xf32>
    %317 = arith.mulf %306, %316 : vector<8x32xf32>
    %318 = vector.broadcast %300 : vector<1x32xf32> to vector<8x32xf32>
    %319 = arith.addf %317, %318 : vector<8x32xf32>
    %cst_130 = arith.constant 0.000000e+00 : f32
    %320 = vector.broadcast %cst_130 : f32 to vector<8x32xf32>
    %321 = arith.maximumf %319, %320 : vector<8x32xf32>
    %322 = arith.truncf %321 : vector<8x32xf32> to vector<8x32xbf16>
    %c10_131 = arith.constant 10 : index
    %c0_132 = arith.constant 0 : index
    %c0_133 = arith.constant 0 : index
    %323 = vector.load %arg2[%c10_131, %c0_132, %c0_133] : memref<17x32x32xbf16, #tpu.memory_space<vmem>>, vector<1x32x32xbf16>
    %324 = vector.shape_cast %323 : vector<1x32x32xbf16> to vector<32x32xbf16>
    %cst_134 = arith.constant dense<0.000000e+00> : vector<8x32xf32>
    %325 = tpu.matmul %322, %324, %cst_134 {dimension_numbers = #tpu.dot_dimension_numbers<[1], [0], [0], [1], [0, 0, 1, 1], [], []>} : vector<8x32xbf16>, vector<32x32xbf16>, vector<8x32xf32> -> vector<8x32xf32>
    %c0_135 = arith.constant 0 : index
    %c0_136 = arith.constant 0 : index
    %326 = vector.load %arg1[%c0_135, %c0_136] : memref<8x32xf32, #tpu.memory_space<vmem>>, vector<8x32xf32>
    %327 = arith.truncf %326 : vector<8x32xf32> to vector<8x32xbf16>
    %c11_137 = arith.constant 11 : index
    %c0_138 = arith.constant 0 : index
    %c0_139 = arith.constant 0 : index
    %328 = vector.load %arg2[%c11_137, %c0_138, %c0_139] : memref<17x32x32xbf16, #tpu.memory_space<vmem>>, vector<1x32x32xbf16>
    %329 = vector.shape_cast %328 : vector<1x32x32xbf16> to vector<32x32xbf16>
    %cst_140 = arith.constant dense<0.000000e+00> : vector<8x32xf32>
    %330 = tpu.matmul %327, %329, %cst_140 {dimension_numbers = #tpu.dot_dimension_numbers<[1], [0], [0], [1], [0, 0, 1, 1], [], []>} : vector<8x32xbf16>, vector<32x32xbf16>, vector<8x32xf32> -> vector<8x32xf32>
    %331 = arith.addf %325, %330 : vector<8x32xf32>
    %c12 = arith.constant 12 : index
    %c0_141 = arith.constant 0 : index
    %c0_142 = arith.constant 0 : index
    %332 = vector.load %arg3[%c12, %c0_141, %c0_142] : memref<18x2x32xf32, #tpu.memory_space<vmem>>, vector<1x2x32xf32>
    %333 = vector.shape_cast %332 : vector<1x2x32xf32> to vector<2x32xf32>
    %334 = vector.extract_strided_slice %333 {offsets = [0, 0], sizes = [1, 32], strides = [1, 1]} : vector<2x32xf32> to vector<1x32xf32>
    %335 = vector.extract_strided_slice %333 {offsets = [1, 0], sizes = [1, 32], strides = [1, 1]} : vector<2x32xf32> to vector<1x32xf32>
    %cst_143 = arith.constant dense<0.000000e+00> : vector<32xf32>
    %336 = vector.multi_reduction <add>, %331, %cst_143 [0] : vector<8x32xf32> to vector<32xf32>
    %337 = vector.shape_cast %336 : vector<32xf32> to vector<1x32xf32>
    %cst_144 = arith.constant 1.250000e-01 : f32
    %338 = vector.broadcast %cst_144 : f32 to vector<1x32xf32>
    %339 = arith.mulf %337, %338 : vector<1x32xf32>
    %340 = vector.broadcast %339 : vector<1x32xf32> to vector<8x32xf32>
    %341 = arith.subf %331, %340 : vector<8x32xf32>
    %342 = arith.mulf %341, %341 : vector<8x32xf32>
    %cst_145 = arith.constant dense<0.000000e+00> : vector<32xf32>
    %343 = vector.multi_reduction <add>, %342, %cst_145 [0] : vector<8x32xf32> to vector<32xf32>
    %344 = vector.shape_cast %343 : vector<32xf32> to vector<1x32xf32>
    %cst_146 = arith.constant 1.250000e-01 : f32
    %345 = vector.broadcast %cst_146 : f32 to vector<1x32xf32>
    %346 = arith.mulf %344, %345 : vector<1x32xf32>
    %cst_147 = arith.constant 9.99999974E-6 : f32
    %347 = vector.broadcast %cst_147 : f32 to vector<1x32xf32>
    %348 = arith.addf %346, %347 : vector<1x32xf32>
    %349 = math.rsqrt %348 : vector<1x32xf32>
    %350 = arith.mulf %334, %349 : vector<1x32xf32>
    %351 = vector.broadcast %350 : vector<1x32xf32> to vector<8x32xf32>
    %352 = arith.mulf %341, %351 : vector<8x32xf32>
    %353 = vector.broadcast %335 : vector<1x32xf32> to vector<8x32xf32>
    %354 = arith.addf %352, %353 : vector<8x32xf32>
    %cst_148 = arith.constant 0.000000e+00 : f32
    %355 = vector.broadcast %cst_148 : f32 to vector<8x32xf32>
    %356 = arith.maximumf %354, %355 : vector<8x32xf32>
    %357 = arith.truncf %356 : vector<8x32xf32> to vector<8x32xbf16>
    %c12_149 = arith.constant 12 : index
    %c0_150 = arith.constant 0 : index
    %c0_151 = arith.constant 0 : index
    %358 = vector.load %arg2[%c12_149, %c0_150, %c0_151] : memref<17x32x32xbf16, #tpu.memory_space<vmem>>, vector<1x32x32xbf16>
    %359 = vector.shape_cast %358 : vector<1x32x32xbf16> to vector<32x32xbf16>
    %cst_152 = arith.constant dense<0.000000e+00> : vector<8x32xf32>
    %360 = tpu.matmul %357, %359, %cst_152 {dimension_numbers = #tpu.dot_dimension_numbers<[1], [0], [0], [1], [0, 0, 1, 1], [], []>} : vector<8x32xbf16>, vector<32x32xbf16>, vector<8x32xf32> -> vector<8x32xf32>
    %c13 = arith.constant 13 : index
    %c0_153 = arith.constant 0 : index
    %c0_154 = arith.constant 0 : index
    %361 = vector.load %arg3[%c13, %c0_153, %c0_154] : memref<18x2x32xf32, #tpu.memory_space<vmem>>, vector<1x2x32xf32>
    %362 = vector.shape_cast %361 : vector<1x2x32xf32> to vector<2x32xf32>
    %363 = vector.extract_strided_slice %362 {offsets = [0, 0], sizes = [1, 32], strides = [1, 1]} : vector<2x32xf32> to vector<1x32xf32>
    %364 = vector.extract_strided_slice %362 {offsets = [1, 0], sizes = [1, 32], strides = [1, 1]} : vector<2x32xf32> to vector<1x32xf32>
    %cst_155 = arith.constant dense<0.000000e+00> : vector<32xf32>
    %365 = vector.multi_reduction <add>, %360, %cst_155 [0] : vector<8x32xf32> to vector<32xf32>
    %366 = vector.shape_cast %365 : vector<32xf32> to vector<1x32xf32>
    %cst_156 = arith.constant 1.250000e-01 : f32
    %367 = vector.broadcast %cst_156 : f32 to vector<1x32xf32>
    %368 = arith.mulf %366, %367 : vector<1x32xf32>
    %369 = vector.broadcast %368 : vector<1x32xf32> to vector<8x32xf32>
    %370 = arith.subf %360, %369 : vector<8x32xf32>
    %371 = arith.mulf %370, %370 : vector<8x32xf32>
    %cst_157 = arith.constant dense<0.000000e+00> : vector<32xf32>
    %372 = vector.multi_reduction <add>, %371, %cst_157 [0] : vector<8x32xf32> to vector<32xf32>
    %373 = vector.shape_cast %372 : vector<32xf32> to vector<1x32xf32>
    %cst_158 = arith.constant 1.250000e-01 : f32
    %374 = vector.broadcast %cst_158 : f32 to vector<1x32xf32>
    %375 = arith.mulf %373, %374 : vector<1x32xf32>
    %cst_159 = arith.constant 9.99999974E-6 : f32
    %376 = vector.broadcast %cst_159 : f32 to vector<1x32xf32>
    %377 = arith.addf %375, %376 : vector<1x32xf32>
    %378 = math.rsqrt %377 : vector<1x32xf32>
    %379 = arith.mulf %363, %378 : vector<1x32xf32>
    %380 = vector.broadcast %379 : vector<1x32xf32> to vector<8x32xf32>
    %381 = arith.mulf %370, %380 : vector<8x32xf32>
    %382 = vector.broadcast %364 : vector<1x32xf32> to vector<8x32xf32>
    %383 = arith.addf %381, %382 : vector<8x32xf32>
    %cst_160 = arith.constant 0.000000e+00 : f32
    %384 = vector.broadcast %cst_160 : f32 to vector<8x32xf32>
    %385 = arith.maximumf %383, %384 : vector<8x32xf32>
    %386 = arith.truncf %385 : vector<8x32xf32> to vector<8x32xbf16>
    %c13_161 = arith.constant 13 : index
    %c0_162 = arith.constant 0 : index
    %c0_163 = arith.constant 0 : index
    %387 = vector.load %arg2[%c13_161, %c0_162, %c0_163] : memref<17x32x32xbf16, #tpu.memory_space<vmem>>, vector<1x32x32xbf16>
    %388 = vector.shape_cast %387 : vector<1x32x32xbf16> to vector<32x32xbf16>
    %cst_164 = arith.constant dense<0.000000e+00> : vector<8x32xf32>
    %389 = tpu.matmul %386, %388, %cst_164 {dimension_numbers = #tpu.dot_dimension_numbers<[1], [0], [0], [1], [0, 0, 1, 1], [], []>} : vector<8x32xbf16>, vector<32x32xbf16>, vector<8x32xf32> -> vector<8x32xf32>
    %c14 = arith.constant 14 : index
    %c0_165 = arith.constant 0 : index
    %c0_166 = arith.constant 0 : index
    %390 = vector.load %arg3[%c14, %c0_165, %c0_166] : memref<18x2x32xf32, #tpu.memory_space<vmem>>, vector<1x2x32xf32>
    %391 = vector.shape_cast %390 : vector<1x2x32xf32> to vector<2x32xf32>
    %392 = vector.extract_strided_slice %391 {offsets = [0, 0], sizes = [1, 32], strides = [1, 1]} : vector<2x32xf32> to vector<1x32xf32>
    %393 = vector.extract_strided_slice %391 {offsets = [1, 0], sizes = [1, 32], strides = [1, 1]} : vector<2x32xf32> to vector<1x32xf32>
    %cst_167 = arith.constant dense<0.000000e+00> : vector<32xf32>
    %394 = vector.multi_reduction <add>, %389, %cst_167 [0] : vector<8x32xf32> to vector<32xf32>
    %395 = vector.shape_cast %394 : vector<32xf32> to vector<1x32xf32>
    %cst_168 = arith.constant 1.250000e-01 : f32
    %396 = vector.broadcast %cst_168 : f32 to vector<1x32xf32>
    %397 = arith.mulf %395, %396 : vector<1x32xf32>
    %398 = vector.broadcast %397 : vector<1x32xf32> to vector<8x32xf32>
    %399 = arith.subf %389, %398 : vector<8x32xf32>
    %400 = arith.mulf %399, %399 : vector<8x32xf32>
    %cst_169 = arith.constant dense<0.000000e+00> : vector<32xf32>
    %401 = vector.multi_reduction <add>, %400, %cst_169 [0] : vector<8x32xf32> to vector<32xf32>
    %402 = vector.shape_cast %401 : vector<32xf32> to vector<1x32xf32>
    %cst_170 = arith.constant 1.250000e-01 : f32
    %403 = vector.broadcast %cst_170 : f32 to vector<1x32xf32>
    %404 = arith.mulf %402, %403 : vector<1x32xf32>
    %cst_171 = arith.constant 9.99999974E-6 : f32
    %405 = vector.broadcast %cst_171 : f32 to vector<1x32xf32>
    %406 = arith.addf %404, %405 : vector<1x32xf32>
    %407 = math.rsqrt %406 : vector<1x32xf32>
    %408 = arith.mulf %392, %407 : vector<1x32xf32>
    %409 = vector.broadcast %408 : vector<1x32xf32> to vector<8x32xf32>
    %410 = arith.mulf %399, %409 : vector<8x32xf32>
    %411 = vector.broadcast %393 : vector<1x32xf32> to vector<8x32xf32>
    %412 = arith.addf %410, %411 : vector<8x32xf32>
    %cst_172 = arith.constant 0.000000e+00 : f32
    %413 = vector.broadcast %cst_172 : f32 to vector<8x32xf32>
    %414 = arith.maximumf %412, %413 : vector<8x32xf32>
    %415 = arith.truncf %414 : vector<8x32xf32> to vector<8x32xbf16>
    %c14_173 = arith.constant 14 : index
    %c0_174 = arith.constant 0 : index
    %c0_175 = arith.constant 0 : index
    %416 = vector.load %arg2[%c14_173, %c0_174, %c0_175] : memref<17x32x32xbf16, #tpu.memory_space<vmem>>, vector<1x32x32xbf16>
    %417 = vector.shape_cast %416 : vector<1x32x32xbf16> to vector<32x32xbf16>
    %cst_176 = arith.constant dense<0.000000e+00> : vector<8x32xf32>
    %418 = tpu.matmul %415, %417, %cst_176 {dimension_numbers = #tpu.dot_dimension_numbers<[1], [0], [0], [1], [0, 0, 1, 1], [], []>} : vector<8x32xbf16>, vector<32x32xbf16>, vector<8x32xf32> -> vector<8x32xf32>
    %c15 = arith.constant 15 : index
    %c0_177 = arith.constant 0 : index
    %c0_178 = arith.constant 0 : index
    %419 = vector.load %arg3[%c15, %c0_177, %c0_178] : memref<18x2x32xf32, #tpu.memory_space<vmem>>, vector<1x2x32xf32>
    %420 = vector.shape_cast %419 : vector<1x2x32xf32> to vector<2x32xf32>
    %421 = vector.extract_strided_slice %420 {offsets = [0, 0], sizes = [1, 32], strides = [1, 1]} : vector<2x32xf32> to vector<1x32xf32>
    %422 = vector.extract_strided_slice %420 {offsets = [1, 0], sizes = [1, 32], strides = [1, 1]} : vector<2x32xf32> to vector<1x32xf32>
    %cst_179 = arith.constant dense<0.000000e+00> : vector<32xf32>
    %423 = vector.multi_reduction <add>, %418, %cst_179 [0] : vector<8x32xf32> to vector<32xf32>
    %424 = vector.shape_cast %423 : vector<32xf32> to vector<1x32xf32>
    %cst_180 = arith.constant 1.250000e-01 : f32
    %425 = vector.broadcast %cst_180 : f32 to vector<1x32xf32>
    %426 = arith.mulf %424, %425 : vector<1x32xf32>
    %427 = vector.broadcast %426 : vector<1x32xf32> to vector<8x32xf32>
    %428 = arith.subf %418, %427 : vector<8x32xf32>
    %429 = arith.mulf %428, %428 : vector<8x32xf32>
    %cst_181 = arith.constant dense<0.000000e+00> : vector<32xf32>
    %430 = vector.multi_reduction <add>, %429, %cst_181 [0] : vector<8x32xf32> to vector<32xf32>
    %431 = vector.shape_cast %430 : vector<32xf32> to vector<1x32xf32>
    %cst_182 = arith.constant 1.250000e-01 : f32
    %432 = vector.broadcast %cst_182 : f32 to vector<1x32xf32>
    %433 = arith.mulf %431, %432 : vector<1x32xf32>
    %cst_183 = arith.constant 9.99999974E-6 : f32
    %434 = vector.broadcast %cst_183 : f32 to vector<1x32xf32>
    %435 = arith.addf %433, %434 : vector<1x32xf32>
    %436 = math.rsqrt %435 : vector<1x32xf32>
    %437 = arith.mulf %421, %436 : vector<1x32xf32>
    %438 = vector.broadcast %437 : vector<1x32xf32> to vector<8x32xf32>
    %439 = arith.mulf %428, %438 : vector<8x32xf32>
    %440 = vector.broadcast %422 : vector<1x32xf32> to vector<8x32xf32>
    %441 = arith.addf %439, %440 : vector<8x32xf32>
    %cst_184 = arith.constant 0.000000e+00 : f32
    %442 = vector.broadcast %cst_184 : f32 to vector<8x32xf32>
    %443 = arith.maximumf %441, %442 : vector<8x32xf32>
    %444 = arith.truncf %443 : vector<8x32xf32> to vector<8x32xbf16>
    %c15_185 = arith.constant 15 : index
    %c0_186 = arith.constant 0 : index
    %c0_187 = arith.constant 0 : index
    %445 = vector.load %arg2[%c15_185, %c0_186, %c0_187] : memref<17x32x32xbf16, #tpu.memory_space<vmem>>, vector<1x32x32xbf16>
    %446 = vector.shape_cast %445 : vector<1x32x32xbf16> to vector<32x32xbf16>
    %cst_188 = arith.constant dense<0.000000e+00> : vector<8x32xf32>
    %447 = tpu.matmul %444, %446, %cst_188 {dimension_numbers = #tpu.dot_dimension_numbers<[1], [0], [0], [1], [0, 0, 1, 1], [], []>} : vector<8x32xbf16>, vector<32x32xbf16>, vector<8x32xf32> -> vector<8x32xf32>
    %c16 = arith.constant 16 : index
    %c0_189 = arith.constant 0 : index
    %c0_190 = arith.constant 0 : index
    %448 = vector.load %arg3[%c16, %c0_189, %c0_190] : memref<18x2x32xf32, #tpu.memory_space<vmem>>, vector<1x2x32xf32>
    %449 = vector.shape_cast %448 : vector<1x2x32xf32> to vector<2x32xf32>
    %450 = vector.extract_strided_slice %449 {offsets = [0, 0], sizes = [1, 32], strides = [1, 1]} : vector<2x32xf32> to vector<1x32xf32>
    %451 = vector.extract_strided_slice %449 {offsets = [1, 0], sizes = [1, 32], strides = [1, 1]} : vector<2x32xf32> to vector<1x32xf32>
    %cst_191 = arith.constant dense<0.000000e+00> : vector<32xf32>
    %452 = vector.multi_reduction <add>, %447, %cst_191 [0] : vector<8x32xf32> to vector<32xf32>
    %453 = vector.shape_cast %452 : vector<32xf32> to vector<1x32xf32>
    %cst_192 = arith.constant 1.250000e-01 : f32
    %454 = vector.broadcast %cst_192 : f32 to vector<1x32xf32>
    %455 = arith.mulf %453, %454 : vector<1x32xf32>
    %456 = vector.broadcast %455 : vector<1x32xf32> to vector<8x32xf32>
    %457 = arith.subf %447, %456 : vector<8x32xf32>
    %458 = arith.mulf %457, %457 : vector<8x32xf32>
    %cst_193 = arith.constant dense<0.000000e+00> : vector<32xf32>
    %459 = vector.multi_reduction <add>, %458, %cst_193 [0] : vector<8x32xf32> to vector<32xf32>
    %460 = vector.shape_cast %459 : vector<32xf32> to vector<1x32xf32>
    %cst_194 = arith.constant 1.250000e-01 : f32
    %461 = vector.broadcast %cst_194 : f32 to vector<1x32xf32>
    %462 = arith.mulf %460, %461 : vector<1x32xf32>
    %cst_195 = arith.constant 9.99999974E-6 : f32
    %463 = vector.broadcast %cst_195 : f32 to vector<1x32xf32>
    %464 = arith.addf %462, %463 : vector<1x32xf32>
    %465 = math.rsqrt %464 : vector<1x32xf32>
    %466 = arith.mulf %450, %465 : vector<1x32xf32>
    %467 = vector.broadcast %466 : vector<1x32xf32> to vector<8x32xf32>
    %468 = arith.mulf %457, %467 : vector<8x32xf32>
    %469 = vector.broadcast %451 : vector<1x32xf32> to vector<8x32xf32>
    %470 = arith.addf %468, %469 : vector<8x32xf32>
    %cst_196 = arith.constant 0.000000e+00 : f32
    %471 = vector.broadcast %cst_196 : f32 to vector<8x32xf32>
    %472 = arith.maximumf %470, %471 : vector<8x32xf32>
    %473 = arith.truncf %472 : vector<8x32xf32> to vector<8x32xbf16>
    %c16_197 = arith.constant 16 : index
    %c0_198 = arith.constant 0 : index
    %c0_199 = arith.constant 0 : index
    %474 = vector.load %arg2[%c16_197, %c0_198, %c0_199] : memref<17x32x32xbf16, #tpu.memory_space<vmem>>, vector<1x32x32xbf16>
    %475 = vector.shape_cast %474 : vector<1x32x32xbf16> to vector<32x32xbf16>
    %cst_200 = arith.constant dense<0.000000e+00> : vector<8x32xf32>
    %476 = tpu.matmul %473, %475, %cst_200 {dimension_numbers = #tpu.dot_dimension_numbers<[1], [0], [0], [1], [0, 0, 1, 1], [], []>} : vector<8x32xbf16>, vector<32x32xbf16>, vector<8x32xf32> -> vector<8x32xf32>
    %c17 = arith.constant 17 : index
    %c0_201 = arith.constant 0 : index
    %c0_202 = arith.constant 0 : index
    %477 = vector.load %arg3[%c17, %c0_201, %c0_202] : memref<18x2x32xf32, #tpu.memory_space<vmem>>, vector<1x2x32xf32>
    %478 = vector.shape_cast %477 : vector<1x2x32xf32> to vector<2x32xf32>
    %479 = vector.extract_strided_slice %478 {offsets = [0, 0], sizes = [1, 32], strides = [1, 1]} : vector<2x32xf32> to vector<1x32xf32>
    %480 = vector.extract_strided_slice %478 {offsets = [1, 0], sizes = [1, 32], strides = [1, 1]} : vector<2x32xf32> to vector<1x32xf32>
    %cst_203 = arith.constant dense<0.000000e+00> : vector<32xf32>
    %481 = vector.multi_reduction <add>, %476, %cst_203 [0] : vector<8x32xf32> to vector<32xf32>
    %482 = vector.shape_cast %481 : vector<32xf32> to vector<1x32xf32>
    %cst_204 = arith.constant 1.250000e-01 : f32
    %483 = vector.broadcast %cst_204 : f32 to vector<1x32xf32>
    %484 = arith.mulf %482, %483 : vector<1x32xf32>
    %485 = vector.broadcast %484 : vector<1x32xf32> to vector<8x32xf32>
    %486 = arith.subf %476, %485 : vector<8x32xf32>
    %487 = arith.mulf %486, %486 : vector<8x32xf32>
    %cst_205 = arith.constant dense<0.000000e+00> : vector<32xf32>
    %488 = vector.multi_reduction <add>, %487, %cst_205 [0] : vector<8x32xf32> to vector<32xf32>
    %489 = vector.shape_cast %488 : vector<32xf32> to vector<1x32xf32>
    %cst_206 = arith.constant 1.250000e-01 : f32
    %490 = vector.broadcast %cst_206 : f32 to vector<1x32xf32>
    %491 = arith.mulf %489, %490 : vector<1x32xf32>
    %cst_207 = arith.constant 9.99999974E-6 : f32
    %492 = vector.broadcast %cst_207 : f32 to vector<1x32xf32>
    %493 = arith.addf %491, %492 : vector<1x32xf32>
    %494 = math.rsqrt %493 : vector<1x32xf32>
    %495 = arith.mulf %479, %494 : vector<1x32xf32>
    %496 = vector.broadcast %495 : vector<1x32xf32> to vector<8x32xf32>
    %497 = arith.mulf %486, %496 : vector<8x32xf32>
    %498 = vector.broadcast %480 : vector<1x32xf32> to vector<8x32xf32>
    %499 = arith.addf %497, %498 : vector<8x32xf32>
    %cst_208 = arith.constant 0.000000e+00 : f32
    %500 = vector.broadcast %cst_208 : f32 to vector<8x32xf32>
    %501 = arith.maximumf %499, %500 : vector<8x32xf32>
    %c0_209 = arith.constant 0 : index
    %c0_210 = arith.constant 0 : index
    %502 = vector.load %arg4[%c0_209, %c0_210] : memref<8x32xf32, #tpu.memory_space<vmem>>, vector<8x32xf32>
    tpu.vector_store %arg4[%c0_209, %c0_210], %501 {strides = array<i32>} : memref<8x32xf32, #tpu.memory_space<vmem>>, vector<8x32xf32>,
    return
  }
}

</mosaic_0001>

<llo_original>
// kernel: context_layer_forward.1
$region0: #{context_layer_forward.1}
  #allocation0 [shape = 'u32[]', space=smem, size = 0x4, offset = 0x4, fixed_abs, tag = 'smem constant byte address 0x4 - core index']
  #allocation1 [shape = 'u32[72,128]{1,0:T(1,128)}', space=vmem, size = 0x9000, scoped, tag = 'internal scratch']
  %s0 = inlined_call_operand.vmem [shape: f32[8,1], index: 0, kind: input, shape index: {}]
  %s1 = inlined_call_operand.vmem [shape: f32[8,32], index: 1, kind: input, shape index: {}]
  %s2 = inlined_call_operand.vmem [shape: bf16[17,32,32], index: 2, kind: input, shape index: {}]
  %s3 = inlined_call_operand.vmem [shape: f32[18,2,32], index: 3, kind: input, shape index: {}]
  %s4 = inlined_call_operand.hbm [shape: f32[8,32], index: 4, kind: output, shape index: {}]
  %s5 = sld [smem:[#allocation0]]
  $region26: #{context_layer_forward.1} parent=0
    _
  %s7 = ssub.s32 1, %s5
  %s8 = scalar_select 0, %s7, %s5
  $region1: #{context_layer_forward.1} parent=0
    #allocation2 [shape = 'u8[4096]{0}', space=vmem, size = 0x1000, scoped, tag = 'output window, operand 0, single buffered']
    #allocation3 [shape = 's32[1]{0}', space=sflag, size = 0x4, scoped, tag = 'scoped memory for context_layer_forward.1']
    %9 = vsyncpa [#allocation3], 0
    // Predicated region
    $region2: #{context_layer_forward.1} parent=1 // pred_check
      _
    $region3: #{context_layer_forward.1} parent=1 // pred_check_branch
      %11 = sbr.rel (0) target = $region5
    $region4: #{context_layer_forward.1} parent=1 // pred_region
      _
    $region5: #{context_layer_forward.1} parent=1 // pred_fallthru
      _
    // Predicated region
    $region6: #{context_layer_forward.1} parent=1 // pred_check
      _
    $region7: #{context_layer_forward.1} parent=1 // pred_check_branch
      %13 = sbr.rel (0) target = $region9
    $region8: #{context_layer_forward.1} parent=1 // pred_region
      _
    $region9: #{context_layer_forward.1} parent=1 // pred_fallthru
      _
    // Predicated region
    $region10: #{context_layer_forward.1} parent=1 // pred_check
      _
    $region11: #{context_layer_forward.1} parent=1 // pred_check_branch
      %15 = sbr.rel (0) target = $region13
    $region12: #{context_layer_forward.1} parent=1 // pred_region
      _
    $region13: #{context_layer_forward.1} parent=1 // pred_fallthru
      _
    // Predicated region
    $region14: #{context_layer_forward.1} parent=1 // pred_check
      _
    $region15: #{context_layer_forward.1} parent=1 // pred_check_branch
      %17 = sbr.rel (0) target = $region17
    $region16: #{context_layer_forward.1} parent=1 // pred_region
      _
    $region17: #{context_layer_forward.1} parent=1 // pred_fallthru
      _
    %v19 = vld [vmem:[%s3] sm:$0x3]
    %s20 = scalar_lea.vmem %s3, 2
    %v21 = vld [vmem:[%s20] sm:$0x3]
    %v22 = vld [vmem:[%s0] sm:$0xff]
    %24 = vset.pattern.permute.xlu0 0
    %25 = vperm.xlu0 %24, %v22
    %v26 = vpop.permute.xlu0 %25
    %v28 = vperm.slane %v19, 0
    %v29 = vmul.f32 %v26, %v28
    %vm30 = vcmask 261120
    %v31 = vsel %vm30, %v29, 0.0
    %v32 = vrot.slane %v31, 4
    %v33 = vadd.f32 %v31, %v32
    %v34 = vrot.slane %v33, 2
    %v35 = vadd.f32 %v33, %v34
    %v36 = vrot.slane %v35, 1
    %v37 = vadd.f32 %v35, %v36
    %v38 = vmul.f32 %v37, 0.125
    %v39 = vsub.f32 %v29, %v38
    %v40 = vmul.f32 %v39, %v39
    %v41 = vsel %vm30, %v40, 0.0
    %v42 = vrot.slane %v41, 4
    %v43 = vadd.f32 %v41, %v42
    %v44 = vrot.slane %v43, 2
    %v45 = vadd.f32 %v43, %v44
    %v46 = vrot.slane %v45, 1
    %v47 = vadd.f32 %v45, %v46
    %v48 = vmul.f32 %v47, 0.125
    %v49 = vadd.f32 %v48, 1e-05
    %v50 = vrsqrt.pop %v49
    %v51 = vmul.f32 %v50, %v49
    %v52 = vmul.f32 %v51, %v50
    %v53 = vmul.f32 0.5, %v52
    %v54 = vsub.f32 1.5, %v53
    %v55 = vmul.f32 %v50, %v54
    %vm56 = vweird.f32 %v49
    %vm57 = vweird.f32 %v50
    %vm58 = vmor %vm56, %vm57
    %v59 = vsel %vm58, %v50, %v55
    %v60 = vmul.f32 %v21, %v59
    %v61 = vperm.slane %v60, 0
    %v62 = vmul.f32 %v39, %v61
    %v63 = vperm.slane %v21, 1
    %v64 = vadd.f32 %v62, %v63
    %v65 = vmax.f32 %v64, 0.0
    %v66 = vpack.c.bf16 %v65, %v65
    %v67 = vld [vmem:[%s2] sm:$0xf]
    %v68 = vld [vmem:[%s2 + $0x4] sm:$0xf]
    %v69 = vld [vmem:[%s2 + $0x8] sm:$0xf]
    %v70 = vld [vmem:[%s2 + $0xc] sm:$0xf]
    %v75 = vunpack.c.l.b16 %v67
    %v76 = vunpack.c.l.b16 %v68
    %v77 = vunpack.c.l.b16 %v69
    %v78 = vunpack.c.l.b16 %v70
    %v79 = vpack.c.b16 %v76, %v75
    %v80 = vpack.c.b16 %v78, %v77
    %v84 = vsel %vm30, %v66, 0
    %86 = vmatpush.bf16.msra.mxu0 0
    %87 = vmatpush.bf16.msra.mxu0 0
    %88 = vmatpush.bf16.msra.mxu0 0
    %89 = vmatpush.bf16.msra.mxu0 0
    %90 = vmatpush.bf16.msra.mxu0 0
    %91 = vmatpush.bf16.msra.mxu0 0
    %92 = vmatpush.bf16.msra.mxu0 %v80
    %93 = vmatpush.bf16.msra.mxu0 %v79
    %94 = vmatmul.bf16.gmra.mxu0 %v84
    %v95 = vpop.f32.mrf.mxu0
    %v96 = vadd.f32 0.0, %v95
    %v97 = vpop.f32.mrf.mxu0
    %98 = vdwg.mxu0
    %s99 = scalar_lea.vmem %s3, 4
    %v100 = vld [vmem:[%s99] sm:$0x3]
    %v101 = vsel %vm30, %v96, 0.0
    %v102 = vrot.slane %v101, 4
    %v103 = vadd.f32 %v101, %v102
    %v104 = vrot.slane %v103, 2
    %v105 = vadd.f32 %v103, %v104
    %v106 = vrot.slane %v105, 1
    %v107 = vadd.f32 %v105, %v106
    %v108 = vmul.f32 %v107, 0.125
    %v109 = vsub.f32 %v96, %v108
    %v110 = vmul.f32 %v109, %v109
    %v111 = vsel %vm30, %v110, 0.0
    %v112 = vrot.slane %v111, 4
    %v113 = vadd.f32 %v111, %v112
    %v114 = vrot.slane %v113, 2
    %v115 = vadd.f32 %v113, %v114
    %v116 = vrot.slane %v115, 1
    %v117 = vadd.f32 %v115, %v116
    %v118 = vmul.f32 %v117, 0.125
    %v119 = vadd.f32 %v118, 1e-05
    %v120 = vrsqrt.pop %v119
    %v121 = vmul.f32 %v120, %v119
    %v122 = vmul.f32 %v121, %v120
    %v123 = vmul.f32 0.5, %v122
    %v124 = vsub.f32 1.5, %v123
    %v125 = vmul.f32 %v120, %v124
    %vm126 = vweird.f32 %v119
    %vm127 = vweird.f32 %v120
    %vm128 = vmor %vm126, %vm127
    %v129 = vsel %vm128, %v120, %v125
    %v130 = vmul.f32 %v100, %v129
    %v131 = vperm.slane %v130, 0
    %v132 = vmul.f32 %v109, %v131
    %v133 = vperm.slane %v100, 1
    %v134 = vadd.f32 %v132, %v133
    %v135 = vmax.f32 %v134, 0.0
    %v136 = vpack.c.bf16 %v135, %v135
    %s137 = scalar_lea.vmem %s2, 16
    %v138 = vld [vmem:[%s137] sm:$0xf]
    %v139 = vld [vmem:[%s137 + $0x4] sm:$0xf]
    %v140 = vld [vmem:[%s137 + $0x8] sm:$0xf]
    %v141 = vld [vmem:[%s137 + $0xc] sm:$0xf]
    %v146 = vunpack.c.l.b16 %v138
    %v147 = vunpack.c.l.b16 %v139
    %v148 = vunpack.c.l.b16 %v140
    %v149 = vunpack.c.l.b16 %v141
    %v150 = vpack.c.b16 %v147, %v146
    %v151 = vpack.c.b16 %v149, %v148
    %v155 = vsel %vm30, %v136, 0
    %157 = vmatpush.bf16.msra.mxu0 0
    %158 = vmatpush.bf16.msra.mxu0 0
    %159 = vmatpush.bf16.msra.mxu0 0
    %160 = vmatpush.bf16.msra.mxu0 0
    %161 = vmatpush.bf16.msra.mxu0 0
    %162 = vmatpush.bf16.msra.mxu0 0
    %163 = vmatpush.bf16.msra.mxu0 %v151
    %164 = vmatpush.bf16.msra.mxu0 %v150
    %165 = vmatmul.bf16.gmra.mxu0 %v155
    %v166 = vpop.f32.mrf.mxu0
    %v167 = vadd.f32 0.0, %v166
    %v168 = vpop.f32.mrf.mxu0
    %169 = vdwg.mxu0
    %s170 = scalar_lea.vmem %s3, 6
    %v171 = vld [vmem:[%s170] sm:$0x3]
    %v172 = vsel %vm30, %v167, 0.0
    %v173 = vrot.slane %v172, 4
    %v174 = vadd.f32 %v172, %v173
    %v175 = vrot.slane %v174, 2
    %v176 = vadd.f32 %v174, %v175
    %v177 = vrot.slane %v176, 1
    %v178 = vadd.f32 %v176, %v177
    %v179 = vmul.f32 %v178, 0.125
    %v180 = vsub.f32 %v167, %v179
    %v181 = vmul.f32 %v180, %v180
    %v182 = vsel %vm30, %v181, 0.0
    %v183 = vrot.slane %v182, 4
    %v184 = vadd.f32 %v182, %v183
    %v185 = vrot.slane %v184, 2
    %v186 = vadd.f32 %v184, %v185
    %v187 = vrot.slane %v186, 1
    %v188 = vadd.f32 %v186, %v187
    %v189 = vmul.f32 %v188, 0.125
    %v190 = vadd.f32 %v189, 1e-05
    %v191 = vrsqrt.pop %v190
    %v192 = vmul.f32 %v191, %v190
    %v193 = vmul.f32 %v192, %v191
    %v194 = vmul.f32 0.5, %v193
    %v195 = vsub.f32 1.5, %v194
    %v196 = vmul.f32 %v191, %v195
    %vm197 = vweird.f32 %v190
    %vm198 = vweird.f32 %v191
    %vm199 = vmor %vm197, %vm198
    %v200 = vsel %vm199, %v191, %v196
    %v201 = vmul.f32 %v171, %v200
    %v202 = vperm.slane %v201, 0
    %v203 = vmul.f32 %v180, %v202
    %v204 = vperm.slane %v171, 1
    %v205 = vadd.f32 %v203, %v204
    %v206 = vmax.f32 %v205, 0.0
    %v207 = vpack.c.bf16 %v206, %v206
    %s208 = scalar_lea.vmem %s2, 32
    %v209 = vld [vmem:[%s208] sm:$0xf]
    %v210 = vld [vmem:[%s208 + $0x4] sm:$0xf]
    %v211 = vld [vmem:[%s208 + $0x8] sm:$0xf]
    %v212 = vld [vmem:[%s208 + $0xc] sm:$0xf]
    %v217 = vunpack.c.l.b16 %v209
    %v218 = vunpack.c.l.b16 %v210
    %v219 = vunpack.c.l.b16 %v211
    %v220 = vunpack.c.l.b16 %v212
    %v221 = vpack.c.b16 %v218, %v217
    %v222 = vpack.c.b16 %v220, %v219
    %v226 = vsel %vm30, %v207, 0
    %228 = vmatpush.bf16.msra.mxu0 0
    %229 = vmatpush.bf16.msra.mxu0 0
    %230 = vmatpush.bf16.msra.mxu0 0
    %231 = vmatpush.bf16.msra.mxu0 0
    %232 = vmatpush.bf16.msra.mxu0 0
    %233 = vmatpush.bf16.msra.mxu0 0
    %234 = vmatpush.bf16.msra.mxu0 %v222
    %235 = vmatpush.bf16.msra.mxu0 %v221
    %236 = vmatmul.bf16.gmra.mxu0 %v226
    %v237 = vpop.f32.mrf.mxu0
    %v238 = vadd.f32 0.0, %v237
    %v239 = vpop.f32.mrf.mxu0
    %240 = vdwg.mxu0
    %s241 = scalar_lea.vmem %s3, 8
    %v242 = vld [vmem:[%s241] sm:$0x3]
    %v243 = vsel %vm30, %v238, 0.0
    %v244 = vrot.slane %v243, 4
    %v245 = vadd.f32 %v243, %v244
    %v246 = vrot.slane %v245, 2
    %v247 = vadd.f32 %v245, %v246
    %v248 = vrot.slane %v247, 1
    %v249 = vadd.f32 %v247, %v248
    %v250 = vmul.f32 %v249, 0.125
    %v251 = vsub.f32 %v238, %v250
    %v252 = vmul.f32 %v251, %v251
    %v253 = vsel %vm30, %v252, 0.0
    %v254 = vrot.slane %v253, 4
    %v255 = vadd.f32 %v253, %v254
    %v256 = vrot.slane %v255, 2
    %v257 = vadd.f32 %v255, %v256
    %v258 = vrot.slane %v257, 1
    %v259 = vadd.f32 %v257, %v258
    %v260 = vmul.f32 %v259, 0.125
    %v261 = vadd.f32 %v260, 1e-05
    %v262 = vrsqrt.pop %v261
    %v263 = vmul.f32 %v262, %v261
    %v264 = vmul.f32 %v263, %v262
    %v265 = vmul.f32 0.5, %v264
    %v266 = vsub.f32 1.5, %v265
    %v267 = vmul.f32 %v262, %v266
    %vm268 = vweird.f32 %v261
    %vm269 = vweird.f32 %v262
    %vm270 = vmor %vm268, %vm269
    %v271 = vsel %vm270, %v262, %v267
    %v272 = vmul.f32 %v242, %v271
    %v273 = vperm.slane %v272, 0
    %v274 = vmul.f32 %v251, %v273
    %v275 = vperm.slane %v242, 1
    %v276 = vadd.f32 %v274, %v275
    %v277 = vmax.f32 %v276, 0.0
    %v278 = vpack.c.bf16 %v277, %v277
    %s279 = scalar_lea.vmem %s2, 48
    %v280 = vld [vmem:[%s279] sm:$0xf]
    %v281 = vld [vmem:[%s279 + $0x4] sm:$0xf]
    %v282 = vld [vmem:[%s279 + $0x8] sm:$0xf]
    %v283 = vld [vmem:[%s279 + $0xc] sm:$0xf]
    %v288 = vunpack.c.l.b16 %v280
    %v289 = vunpack.c.l.b16 %v281
    %v290 = vunpack.c.l.b16 %v282
    %v291 = vunpack.c.l.b16 %v283
    %v292 = vpack.c.b16 %v289, %v288
    %v293 = vpack.c.b16 %v291, %v290
    %v297 = vsel %vm30, %v278, 0
    %299 = vmatpush.bf16.msra.mxu0 0
    %300 = vmatpush.bf16.msra.mxu0 0
    %301 = vmatpush.bf16.msra.mxu0 0
    %302 = vmatpush.bf16.msra.mxu0 0
    %303 = vmatpush.bf16.msra.mxu0 0
    %304 = vmatpush.bf16.msra.mxu0 0
    %305 = vmatpush.bf16.msra.mxu0 %v293
    %306 = vmatpush.bf16.msra.mxu0 %v292
    %307 = vmatmul.bf16.gmra.mxu0 %v297
    %v308 = vpop.f32.mrf.mxu0
    %v309 = vadd.f32 0.0, %v308
    %v310 = vpop.f32.mrf.mxu0
    %311 = vdwg.mxu0
    %s312 = scalar_lea.vmem %s3, 10
    %v313 = vld [vmem:[%s312] sm:$0x3]
    %v314 = vsel %vm30, %v309, 0.0
    %v315 = vrot.slane %v314, 4
    %v316 = vadd.f32 %v314, %v315
    %v317 = vrot.slane %v316, 2
    %v318 = vadd.f32 %v316, %v317
    %v319 = vrot.slane %v318, 1
    %v320 = vadd.f32 %v318, %v319
    %v321 = vmul.f32 %v320, 0.125
    %v322 = vsub.f32 %v309, %v321
    %v323 = vmul.f32 %v322, %v322
    %v324 = vsel %vm30, %v323, 0.0
    %v325 = vrot.slane %v324, 4
    %v326 = vadd.f32 %v324, %v325
    %v327 = vrot.slane %v326, 2
    %v328 = vadd.f32 %v326, %v327
    %v329 = vrot.slane %v328, 1
    %v330 = vadd.f32 %v328, %v329
    %v331 = vmul.f32 %v330, 0.125
    %v332 = vadd.f32 %v331, 1e-05
    %v333 = vrsqrt.pop %v332
    %v334 = vmul.f32 %v333, %v332
    %v335 = vmul.f32 %v334, %v333
    %v336 = vmul.f32 0.5, %v335
    %v337 = vsub.f32 1.5, %v336
    %v338 = vmul.f32 %v333, %v337
    %vm339 = vweird.f32 %v332
    %vm340 = vweird.f32 %v333
    %vm341 = vmor %vm339, %vm340
    %v342 = vsel %vm341, %v333, %v338
    %v343 = vmul.f32 %v313, %v342
    %v344 = vperm.slane %v343, 0
    %v345 = vmul.f32 %v322, %v344
    %v346 = vperm.slane %v313, 1
    %v347 = vadd.f32 %v345, %v346
    %v348 = vmax.f32 %v347, 0.0
    %v349 = vpack.c.bf16 %v348, %v348
    %s350 = scalar_lea.vmem %s2, 64
    %v351 = vld [vmem:[%s350] sm:$0xf]
    %v352 = vld [vmem:[%s350 + $0x4] sm:$0xf]
    %v353 = vld [vmem:[%s350 + $0x8] sm:$0xf]
    %v354 = vld [vmem:[%s350 + $0xc] sm:$0xf]
    %v359 = vunpack.c.l.b16 %v351
    %v360 = vunpack.c.l.b16 %v352
    %v361 = vunpack.c.l.b16 %v353
    %v362 = vunpack.c.l.b16 %v354
    %v363 = vpack.c.b16 %v360, %v359
    %v364 = vpack.c.b16 %v362, %v361
    %v368 = vsel %vm30, %v349, 0
    %370 = vmatpush.bf16.msra.mxu0 0
    %371 = vmatpush.bf16.msra.mxu0 0
    %372 = vmatpush.bf16.msra.mxu0 0
    %373 = vmatpush.bf16.msra.mxu0 0
    %374 = vmatpush.bf16.msra.mxu0 0
    %375 = vmatpush.bf16.msra.mxu0 0
    %376 = vmatpush.bf16.msra.mxu0 %v364
    %377 = vmatpush.bf16.msra.mxu0 %v363
    %378 = vmatmul.bf16.gmra.mxu0 %v368
    %v379 = vpop.f32.mrf.mxu0
    %v380 = vadd.f32 0.0, %v379
    %v381 = vpop.f32.mrf.mxu0
    %382 = vdwg.mxu0
    %s383 = scalar_lea.vmem %s3, 12
    %v384 = vld [vmem:[%s383] sm:$0x3]
    %v385 = vsel %vm30, %v380, 0.0
    %v386 = vrot.slane %v385, 4
    %v387 = vadd.f32 %v385, %v386
    %v388 = vrot.slane %v387, 2
    %v389 = vadd.f32 %v387, %v388
    %v390 = vrot.slane %v389, 1
    %v391 = vadd.f32 %v389, %v390
    %v392 = vmul.f32 %v391, 0.125
    %v393 = vsub.f32 %v380, %v392
    %v394 = vmul.f32 %v393, %v393
    %v395 = vsel %vm30, %v394, 0.0
    %v396 = vrot.slane %v395, 4
    %v397 = vadd.f32 %v395, %v396
    %v398 = vrot.slane %v397, 2
    %v399 = vadd.f32 %v397, %v398
    %v400 = vrot.slane %v399, 1
    %v401 = vadd.f32 %v399, %v400
    %v402 = vmul.f32 %v401, 0.125
    %v403 = vadd.f32 %v402, 1e-05
    %v404 = vrsqrt.pop %v403
    %v405 = vmul.f32 %v404, %v403
    %v406 = vmul.f32 %v405, %v404
    %v407 = vmul.f32 0.5, %v406
    %v408 = vsub.f32 1.5, %v407
    %v409 = vmul.f32 %v404, %v408
    %vm410 = vweird.f32 %v403
    %vm411 = vweird.f32 %v404
    %vm412 = vmor %vm410, %vm411
    %v413 = vsel %vm412, %v404, %v409
    %v414 = vmul.f32 %v384, %v413
    %v415 = vperm.slane %v414, 0
    %v416 = vmul.f32 %v393, %v415
    %v417 = vperm.slane %v384, 1
    %v418 = vadd.f32 %v416, %v417
    %v419 = vmax.f32 %v418, 0.0
    %v420 = vpack.c.bf16 %v419, %v419
    %s421 = scalar_lea.vmem %s2, 80
    %v422 = vld [vmem:[%s421] sm:$0xf]
    %v423 = vld [vmem:[%s421 + $0x4] sm:$0xf]
    %v424 = vld [vmem:[%s421 + $0x8] sm:$0xf]
    %v425 = vld [vmem:[%s421 + $0xc] sm:$0xf]
    %v430 = vunpack.c.l.b16 %v422
    %v431 = vunpack.c.l.b16 %v423
    %v432 = vunpack.c.l.b16 %v424
    %v433 = vunpack.c.l.b16 %v425
    %v434 = vpack.c.b16 %v431, %v430
    %v435 = vpack.c.b16 %v433, %v432
    %v439 = vsel %vm30, %v420, 0
    %441 = vmatpush.bf16.msra.mxu0 0
    %442 = vmatpush.bf16.msra.mxu0 0
    %443 = vmatpush.bf16.msra.mxu0 0
    %444 = vmatpush.bf16.msra.mxu0 0
    %445 = vmatpush.bf16.msra.mxu0 0
    %446 = vmatpush.bf16.msra.mxu0 0
    %447 = vmatpush.bf16.msra.mxu0 %v435
    %448 = vmatpush.bf16.msra.mxu0 %v434
    %449 = vmatmul.bf16.gmra.mxu0 %v439
    %v450 = vpop.f32.mrf.mxu0
    %v451 = vadd.f32 0.0, %v450
    %v452 = vpop.f32.mrf.mxu0
    %453 = vdwg.mxu0
    %s454 = scalar_lea.vmem %s3, 14
    %v455 = vld [vmem:[%s454] sm:$0x3]
    %v456 = vsel %vm30, %v451, 0.0
    %v457 = vrot.slane %v456, 4
    %v458 = vadd.f32 %v456, %v457
    %v459 = vrot.slane %v458, 2
    %v460 = vadd.f32 %v458, %v459
    %v461 = vrot.slane %v460, 1
    %v462 = vadd.f32 %v460, %v461
    %v463 = vmul.f32 %v462, 0.125
    %v464 = vsub.f32 %v451, %v463
    %v465 = vmul.f32 %v464, %v464
    %v466 = vsel %vm30, %v465, 0.0
    %v467 = vrot.slane %v466, 4
    %v468 = vadd.f32 %v466, %v467
    %v469 = vrot.slane %v468, 2
    %v470 = vadd.f32 %v468, %v469
    %v471 = vrot.slane %v470, 1
    %v472 = vadd.f32 %v470, %v471
    %v473 = vmul.f32 %v472, 0.125
    %v474 = vadd.f32 %v473, 1e-05
    %v475 = vrsqrt.pop %v474
    %v476 = vmul.f32 %v475, %v474
    %v477 = vmul.f32 %v476, %v475
    %v478 = vmul.f32 0.5, %v477
    %v479 = vsub.f32 1.5, %v478
    %v480 = vmul.f32 %v475, %v479
    %vm481 = vweird.f32 %v474
    %vm482 = vweird.f32 %v475
    %vm483 = vmor %vm481, %vm482
    %v484 = vsel %vm483, %v475, %v480
    %v485 = vmul.f32 %v455, %v484
    %v486 = vperm.slane %v485, 0
    %v487 = vmul.f32 %v464, %v486
    %v488 = vperm.slane %v455, 1
    %v489 = vadd.f32 %v487, %v488
    %v490 = vmax.f32 %v489, 0.0
    %v491 = vpack.c.bf16 %v490, %v490
    %s492 = scalar_lea.vmem %s2, 96
    %v493 = vld [vmem:[%s492] sm:$0xf]
    %v494 = vld [vmem:[%s492 + $0x4] sm:$0xf]
    %v495 = vld [vmem:[%s492 + $0x8] sm:$0xf]
    %v496 = vld [vmem:[%s492 + $0xc] sm:$0xf]
    %v501 = vunpack.c.l.b16 %v493
    %v502 = vunpack.c.l.b16 %v494
    %v503 = vunpack.c.l.b16 %v495
    %v504 = vunpack.c.l.b16 %v496
    %v505 = vpack.c.b16 %v502, %v501
    %v506 = vpack.c.b16 %v504, %v503
    %v510 = vsel %vm30, %v491, 0
    %512 = vmatpush.bf16.msra.mxu0 0
    %513 = vmatpush.bf16.msra.mxu0 0
    %514 = vmatpush.bf16.msra.mxu0 0
    %515 = vmatpush.bf16.msra.mxu0 0
    %516 = vmatpush.bf16.msra.mxu0 0
    %517 = vmatpush.bf16.msra.mxu0 0
    %518 = vmatpush.bf16.msra.mxu0 %v506
    %519 = vmatpush.bf16.msra.mxu0 %v505
    %520 = vmatmul.bf16.gmra.mxu0 %v510
    %v521 = vpop.f32.mrf.mxu0
    %v522 = vadd.f32 0.0, %v521
    %v523 = vpop.f32.mrf.mxu0
    %524 = vdwg.mxu0
    %s525 = scalar_lea.vmem %s3, 16
    %v526 = vld [vmem:[%s525] sm:$0x3]
    %v527 = vsel %vm30, %v522, 0.0
    %v528 = vrot.slane %v527, 4
    %v529 = vadd.f32 %v527, %v528
    %v530 = vrot.slane %v529, 2
    %v531 = vadd.f32 %v529, %v530
    %v532 = vrot.slane %v531, 1
    %v533 = vadd.f32 %v531, %v532
    %v534 = vmul.f32 %v533, 0.125
    %v535 = vsub.f32 %v522, %v534
    %v536 = vmul.f32 %v535, %v535
    %v537 = vsel %vm30, %v536, 0.0
    %v538 = vrot.slane %v537, 4
    %v539 = vadd.f32 %v537, %v538
    %v540 = vrot.slane %v539, 2
    %v541 = vadd.f32 %v539, %v540
    %v542 = vrot.slane %v541, 1
    %v543 = vadd.f32 %v541, %v542
    %v544 = vmul.f32 %v543, 0.125
    %v545 = vadd.f32 %v544, 1e-05
    %v546 = vrsqrt.pop %v545
    %v547 = vmul.f32 %v546, %v545
    %v548 = vmul.f32 %v547, %v546
    %v549 = vmul.f32 0.5, %v548
    %v550 = vsub.f32 1.5, %v549
    %v551 = vmul.f32 %v546, %v550
    %vm552 = vweird.f32 %v545
    %vm553 = vweird.f32 %v546
    %vm554 = vmor %vm552, %vm553
    %v555 = vsel %vm554, %v546, %v551
    %v556 = vmul.f32 %v526, %v555
    %v557 = vperm.slane %v556, 0
    %v558 = vmul.f32 %v535, %v557
    %v559 = vperm.slane %v526, 1
    %v560 = vadd.f32 %v558, %v559
    %v561 = vmax.f32 %v560, 0.0
    %v562 = vpack.c.bf16 %v561, %v561
    %s563 = scalar_lea.vmem %s2, 112
    %v564 = vld [vmem:[%s563] sm:$0xf]
    %v565 = vld [vmem:[%s563 + $0x4] sm:$0xf]
    %v566 = vld [vmem:[%s563 + $0x8] sm:$0xf]
    %v567 = vld [vmem:[%s563 + $0xc] sm:$0xf]
    %v572 = vunpack.c.l.b16 %v564
    %v573 = vunpack.c.l.b16 %v565
    %v574 = vunpack.c.l.b16 %v566
    %v575 = vunpack.c.l.b16 %v567
    %v576 = vpack.c.b16 %v573, %v572
    %v577 = vpack.c.b16 %v575, %v574
    %v581 = vsel %vm30, %v562, 0
    %583 = vmatpush.bf16.msra.mxu0 0
    %584 = vmatpush.bf16.msra.mxu0 0
    %585 = vmatpush.bf16.msra.mxu0 0
    %586 = vmatpush.bf16.msra.mxu0 0
    %587 = vmatpush.bf16.msra.mxu0 0
    %588 = vmatpush.bf16.msra.mxu0 0
    %589 = vmatpush.bf16.msra.mxu0 %v577
    %590 = vmatpush.bf16.msra.mxu0 %v576
    %591 = vmatmul.bf16.gmra.mxu0 %v581
    %v592 = vpop.f32.mrf.mxu0
    %v593 = vadd.f32 0.0, %v592
    %v594 = vpop.f32.mrf.mxu0
    %595 = vdwg.mxu0
    %s596 = scalar_lea.vmem %s3, 18
    %v597 = vld [vmem:[%s596] sm:$0x3]
    %v598 = vsel %vm30, %v593, 0.0
    %v599 = vrot.slane %v598, 4
    %v600 = vadd.f32 %v598, %v599
    %v601 = vrot.slane %v600, 2
    %v602 = vadd.f32 %v600, %v601
    %v603 = vrot.slane %v602, 1
    %v604 = vadd.f32 %v602, %v603
    %v605 = vmul.f32 %v604, 0.125
    %v606 = vsub.f32 %v593, %v605
    %v607 = vmul.f32 %v606, %v606
    %v608 = vsel %vm30, %v607, 0.0
    %v609 = vrot.slane %v608, 4
    %v610 = vadd.f32 %v608, %v609
    %v611 = vrot.slane %v610, 2
    %v612 = vadd.f32 %v610, %v611
    %v613 = vrot.slane %v612, 1
    %v614 = vadd.f32 %v612, %v613
    %v615 = vmul.f32 %v614, 0.125
    %v616 = vadd.f32 %v615, 1e-05
    %v617 = vrsqrt.pop %v616
    %v618 = vmul.f32 %v617, %v616
    %v619 = vmul.f32 %v618, %v617
    %v620 = vmul.f32 0.5, %v619
    %v621 = vsub.f32 1.5, %v620
    %v622 = vmul.f32 %v617, %v621
    %vm623 = vweird.f32 %v616
    %vm624 = vweird.f32 %v617
    %vm625 = vmor %vm623, %vm624
    %v626 = vsel %vm625, %v617, %v622
    %v627 = vmul.f32 %v597, %v626
    %v628 = vperm.slane %v627, 0
    %v629 = vmul.f32 %v606, %v628
    %v630 = vperm.slane %v597, 1
    %v631 = vadd.f32 %v629, %v630
    %v632 = vmax.f32 %v631, 0.0
    %v633 = vpack.c.bf16 %v632, %v632
    %s634 = scalar_lea.vmem %s2, 128
    %v635 = vld [vmem:[%s634] sm:$0xf]
    %v636 = vld [vmem:[%s634 + $0x4] sm:$0xf]
    %v637 = vld [vmem:[%s634 + $0x8] sm:$0xf]
    %v638 = vld [vmem:[%s634 + $0xc] sm:$0xf]
    %v643 = vunpack.c.l.b16 %v635
    %v644 = vunpack.c.l.b16 %v636
    %v645 = vunpack.c.l.b16 %v637
    %v646 = vunpack.c.l.b16 %v638
    %v647 = vpack.c.b16 %v644, %v643
    %v648 = vpack.c.b16 %v646, %v645
    %v652 = vsel %vm30, %v633, 0
    %654 = vmatpush.bf16.msra.mxu0 0
    %655 = vmatpush.bf16.msra.mxu0 0
    %656 = vmatpush.bf16.msra.mxu0 0
    %657 = vmatpush.bf16.msra.mxu0 0
    %658 = vmatpush.bf16.msra.mxu0 0
    %659 = vmatpush.bf16.msra.mxu0 0
    %660 = vmatpush.bf16.msra.mxu0 %v648
    %661 = vmatpush.bf16.msra.mxu0 %v647
    %662 = vmatmul.bf16.gmra.mxu0 %v652
    %v663 = vpop.f32.mrf.mxu0
    %v664 = vadd.f32 0.0, %v663
    %v665 = vpop.f32.mrf.mxu0
    %666 = vdwg.mxu0
    %s667 = scalar_lea.vmem %s3, 20
    %v668 = vld [vmem:[%s667] sm:$0x3]
    %v669 = vsel %vm30, %v664, 0.0
    %v670 = vrot.slane %v669, 4
    %v671 = vadd.f32 %v669, %v670
    %v672 = vrot.slane %v671, 2
    %v673 = vadd.f32 %v671, %v672
    %v674 = vrot.slane %v673, 1
    %v675 = vadd.f32 %v673, %v674
    %v676 = vmul.f32 %v675, 0.125
    %v677 = vsub.f32 %v664, %v676
    %v678 = vmul.f32 %v677, %v677
    %v679 = vsel %vm30, %v678, 0.0
    %v680 = vrot.slane %v679, 4
    %v681 = vadd.f32 %v679, %v680
    %v682 = vrot.slane %v681, 2
    %v683 = vadd.f32 %v681, %v682
    %v684 = vrot.slane %v683, 1
    %v685 = vadd.f32 %v683, %v684
    %v686 = vmul.f32 %v685, 0.125
    %v687 = vadd.f32 %v686, 1e-05
    %v688 = vrsqrt.pop %v687
    %v689 = vmul.f32 %v688, %v687
    %v690 = vmul.f32 %v689, %v688
    %v691 = vmul.f32 0.5, %v690
    %v692 = vsub.f32 1.5, %v691
    %v693 = vmul.f32 %v688, %v692
    %vm694 = vweird.f32 %v687
    %vm695 = vweird.f32 %v688
    %vm696 = vmor %vm694, %vm695
    %v697 = vsel %vm696, %v688, %v693
    %v698 = vmul.f32 %v668, %v697
    %v699 = vperm.slane %v698, 0
    %v700 = vmul.f32 %v677, %v699
    %v701 = vperm.slane %v668, 1
    %v702 = vadd.f32 %v700, %v701
    %v703 = vmax.f32 %v702, 0.0
    %v704 = vpack.c.bf16 %v703, %v703
    %s705 = scalar_lea.vmem %s2, 144
    %v706 = vld [vmem:[%s705] sm:$0xf]
    %v707 = vld [vmem:[%s705 + $0x4] sm:$0xf]
    %v708 = vld [vmem:[%s705 + $0x8] sm:$0xf]
    %v709 = vld [vmem:[%s705 + $0xc] sm:$0xf]
    %v714 = vunpack.c.l.b16 %v706
    %v715 = vunpack.c.l.b16 %v707
    %v716 = vunpack.c.l.b16 %v708
    %v717 = vunpack.c.l.b16 %v709
    %v718 = vpack.c.b16 %v715, %v714
    %v719 = vpack.c.b16 %v717, %v716
    %v723 = vsel %vm30, %v704, 0
    %725 = vmatpush.bf16.msra.mxu0 0
    %726 = vmatpush.bf16.msra.mxu0 0
    %727 = vmatpush.bf16.msra.mxu0 0
    %728 = vmatpush.bf16.msra.mxu0 0
    %729 = vmatpush.bf16.msra.mxu0 0
    %730 = vmatpush.bf16.msra.mxu0 0
    %731 = vmatpush.bf16.msra.mxu0 %v719
    %732 = vmatpush.bf16.msra.mxu0 %v718
    %733 = vmatmul.bf16.gmra.mxu0 %v723
    %v734 = vpop.f32.mrf.mxu0
    %v735 = vadd.f32 0.0, %v734
    %v736 = vpop.f32.mrf.mxu0
    %737 = vdwg.mxu0
    %s738 = scalar_lea.vmem %s3, 22
    %v739 = vld [vmem:[%s738] sm:$0x3]
    %v740 = vsel %vm30, %v735, 0.0
    %v741 = vrot.slane %v740, 4
    %v742 = vadd.f32 %v740, %v741
    %v743 = vrot.slane %v742, 2
    %v744 = vadd.f32 %v742, %v743
    %v745 = vrot.slane %v744, 1
    %v746 = vadd.f32 %v744, %v745
    %v747 = vmul.f32 %v746, 0.125
    %v748 = vsub.f32 %v735, %v747
    %v749 = vmul.f32 %v748, %v748
    %v750 = vsel %vm30, %v749, 0.0
    %v751 = vrot.slane %v750, 4
    %v752 = vadd.f32 %v750, %v751
    %v753 = vrot.slane %v752, 2
    %v754 = vadd.f32 %v752, %v753
    %v755 = vrot.slane %v754, 1
    %v756 = vadd.f32 %v754, %v755
    %v757 = vmul.f32 %v756, 0.125
    %v758 = vadd.f32 %v757, 1e-05
    %v759 = vrsqrt.pop %v758
    %v760 = vmul.f32 %v759, %v758
    %v761 = vmul.f32 %v760, %v759
    %v762 = vmul.f32 0.5, %v761
    %v763 = vsub.f32 1.5, %v762
    %v764 = vmul.f32 %v759, %v763
    %vm765 = vweird.f32 %v758
    %vm766 = vweird.f32 %v759
    %vm767 = vmor %vm765, %vm766
    %v768 = vsel %vm767, %v759, %v764
    %v769 = vmul.f32 %v739, %v768
    %v770 = vperm.slane %v769, 0
    %v771 = vmul.f32 %v748, %v770
    %v772 = vperm.slane %v739, 1
    %v773 = vadd.f32 %v771, %v772
    %v774 = vmax.f32 %v773, 0.0
    %v775 = vpack.c.bf16 %v774, %v774
    %s776 = scalar_lea.vmem %s2, 160
    %v777 = vld [vmem:[%s776] sm:$0xf]
    %v778 = vld [vmem:[%s776 + $0x4] sm:$0xf]
    %v779 = vld [vmem:[%s776 + $0x8] sm:$0xf]
    %v780 = vld [vmem:[%s776 + $0xc] sm:$0xf]
    %v781 = vld [vmem:[%s1] sm:$0xff]
    %v782 = vpack.c.bf16 %v781, %v781
    %s783 = scalar_lea.vmem %s2, 176
    %v784 = vld [vmem:[%s783] sm:$0xf]
    %v785 = vld [vmem:[%s783 + $0x4] sm:$0xf]
    %v786 = vld [vmem:[%s783 + $0x8] sm:$0xf]
    %v787 = vld [vmem:[%s783 + $0xc] sm:$0xf]
    %v792 = vunpack.c.l.b16 %v784
    %v793 = vunpack.c.l.b16 %v785
    %v794 = vunpack.c.l.b16 %v786
    %v795 = vunpack.c.l.b16 %v787
    %v796 = vpack.c.b16 %v793, %v792
    %v797 = vpack.c.b16 %v795, %v794
    %v801 = vsel %vm30, %v782, 0
    %803 = vmatpush.bf16.msra.mxu0 0
    %804 = vmatpush.bf16.msra.mxu0 0
    %805 = vmatpush.bf16.msra.mxu0 0
    %806 = vmatpush.bf16.msra.mxu0 0
    %807 = vmatpush.bf16.msra.mxu0 0
    %808 = vmatpush.bf16.msra.mxu0 0
    %809 = vmatpush.bf16.msra.mxu0 %v797
    %810 = vmatpush.bf16.msra.mxu0 %v796
    %811 = vmatmul.bf16.gmra.mxu0 %v801
    %v812 = vpop.f32.mrf.mxu0
    %v813 = vadd.f32 0.0, %v812
    %v814 = vpop.f32.mrf.mxu0
    %815 = vdwg.mxu0
    %v820 = vunpack.c.l.b16 %v777
    %v821 = vunpack.c.l.b16 %v778
    %v822 = vunpack.c.l.b16 %v779
    %v823 = vunpack.c.l.b16 %v780
    %v824 = vpack.c.b16 %v821, %v820
    %v825 = vpack.c.b16 %v823, %v822
    %v829 = vsel %vm30, %v775, 0
    %831 = vmatpush.bf16.msra.mxu0 0
    %832 = vmatpush.bf16.msra.mxu0 0
    %833 = vmatpush.bf16.msra.mxu0 0
    %834 = vmatpush.bf16.msra.mxu0 0
    %835 = vmatpush.bf16.msra.mxu0 0
    %836 = vmatpush.bf16.msra.mxu0 0
    %837 = vmatpush.bf16.msra.mxu0 %v825
    %838 = vmatpush.bf16.msra.mxu0 %v824
    %839 = vmatmul.bf16.gmra.mxu0 %v829
    %v840 = vpop.f32.mrf.mxu0
    %v841 = vadd.f32 %v813, %v840
    %v842 = vpop.f32.mrf.mxu0
    %843 = vdwg.mxu0
    %s844 = scalar_lea.vmem %s3, 24
    %v845 = vld [vmem:[%s844] sm:$0x3]
    %v846 = vsel %vm30, %v841, 0.0
    %v847 = vrot.slane %v846, 4
    %v848 = vadd.f32 %v846, %v847
    %v849 = vrot.slane %v848, 2
    %v850 = vadd.f32 %v848, %v849
    %v851 = vrot.slane %v850, 1
    %v852 = vadd.f32 %v850, %v851
    %v853 = vmul.f32 %v852, 0.125
    %v854 = vsub.f32 %v841, %v853
    %v855 = vmul.f32 %v854, %v854
    %v856 = vsel %vm30, %v855, 0.0
    %v857 = vrot.slane %v856, 4
    %v858 = vadd.f32 %v856, %v857
    %v859 = vrot.slane %v858, 2
    %v860 = vadd.f32 %v858, %v859
    %v861 = vrot.slane %v860, 1
    %v862 = vadd.f32 %v860, %v861
    %v863 = vmul.f32 %v862, 0.125
    %v864 = vadd.f32 %v863, 1e-05
    %v865 = vrsqrt.pop %v864
    %v866 = vmul.f32 %v865, %v864
    %v867 = vmul.f32 %v866, %v865
    %v868 = vmul.f32 0.5, %v867
    %v869 = vsub.f32 1.5, %v868
    %v870 = vmul.f32 %v865, %v869
    %vm871 = vweird.f32 %v864
    %vm872 = vweird.f32 %v865
    %vm873 = vmor %vm871, %vm872
    %v874 = vsel %vm873, %v865, %v870
    %v875 = vmul.f32 %v845, %v874
    %v876 = vperm.slane %v875, 0
    %v877 = vmul.f32 %v854, %v876
    %v878 = vperm.slane %v845, 1
    %v879 = vadd.f32 %v877, %v878
    %v880 = vmax.f32 %v879, 0.0
    %v881 = vpack.c.bf16 %v880, %v880
    %s882 = scalar_lea.vmem %s2, 192
    %v883 = vld [vmem:[%s882] sm:$0xf]
    %v884 = vld [vmem:[%s882 + $0x4] sm:$0xf]
    %v885 = vld [vmem:[%s882 + $0x8] sm:$0xf]
    %v886 = vld [vmem:[%s882 + $0xc] sm:$0xf]
    %v891 = vunpack.c.l.b16 %v883
    %v892 = vunpack.c.l.b16 %v884
    %v893 = vunpack.c.l.b16 %v885
    %v894 = vunpack.c.l.b16 %v886
    %v895 = vpack.c.b16 %v892, %v891
    %v896 = vpack.c.b16 %v894, %v893
    %v900 = vsel %vm30, %v881, 0
    %902 = vmatpush.bf16.msra.mxu0 0
    %903 = vmatpush.bf16.msra.mxu0 0
    %904 = vmatpush.bf16.msra.mxu0 0
    %905 = vmatpush.bf16.msra.mxu0 0
    %906 = vmatpush.bf16.msra.mxu0 0
    %907 = vmatpush.bf16.msra.mxu0 0
    %908 = vmatpush.bf16.msra.mxu0 %v896
    %909 = vmatpush.bf16.msra.mxu0 %v895
    %910 = vmatmul.bf16.gmra.mxu0 %v900
    %v911 = vpop.f32.mrf.mxu0
    %v912 = vadd.f32 0.0, %v911
    %v913 = vpop.f32.mrf.mxu0
    %914 = vdwg.mxu0
    %s915 = scalar_lea.vmem %s3, 26
    %v916 = vld [vmem:[%s915] sm:$0x3]
    %v917 = vsel %vm30, %v912, 0.0
    %v918 = vrot.slane %v917, 4
    %v919 = vadd.f32 %v917, %v918
    %v920 = vrot.slane %v919, 2
    %v921 = vadd.f32 %v919, %v920
    %v922 = vrot.slane %v921, 1
    %v923 = vadd.f32 %v921, %v922
    %v924 = vmul.f32 %v923, 0.125
    %v925 = vsub.f32 %v912, %v924
    %v926 = vmul.f32 %v925, %v925
    %v927 = vsel %vm30, %v926, 0.0
    %v928 = vrot.slane %v927, 4
    %v929 = vadd.f32 %v927, %v928
    %v930 = vrot.slane %v929, 2
    %v931 = vadd.f32 %v929, %v930
    %v932 = vrot.slane %v931, 1
    %v933 = vadd.f32 %v931, %v932
    %v934 = vmul.f32 %v933, 0.125
    %v935 = vadd.f32 %v934, 1e-05
    %v936 = vrsqrt.pop %v935
    %v937 = vmul.f32 %v936, %v935
    %v938 = vmul.f32 %v937, %v936
    %v939 = vmul.f32 0.5, %v938
    %v940 = vsub.f32 1.5, %v939
    %v941 = vmul.f32 %v936, %v940
    %vm942 = vweird.f32 %v935
    %vm943 = vweird.f32 %v936
    %vm944 = vmor %vm942, %vm943
    %v945 = vsel %vm944, %v936, %v941
    %v946 = vmul.f32 %v916, %v945
    %v947 = vperm.slane %v946, 0
    %v948 = vmul.f32 %v925, %v947
    %v949 = vperm.slane %v916, 1
    %v950 = vadd.f32 %v948, %v949
    %v951 = vmax.f32 %v950, 0.0
    %v952 = vpack.c.bf16 %v951, %v951
    %s953 = scalar_lea.vmem %s2, 208
    %v954 = vld [vmem:[%s953] sm:$0xf]
    %v955 = vld [vmem:[%s953 + $0x4] sm:$0xf]
    %v956 = vld [vmem:[%s953 + $0x8] sm:$0xf]
    %v957 = vld [vmem:[%s953 + $0xc] sm:$0xf]
    %v962 = vunpack.c.l.b16 %v954
    %v963 = vunpack.c.l.b16 %v955
    %v964 = vunpack.c.l.b16 %v956
    %v965 = vunpack.c.l.b16 %v957
    %v966 = vpack.c.b16 %v963, %v962
    %v967 = vpack.c.b16 %v965, %v964
    %v971 = vsel %vm30, %v952, 0
    %973 = vmatpush.bf16.msra.mxu0 0
    %974 = vmatpush.bf16.msra.mxu0 0
    %975 = vmatpush.bf16.msra.mxu0 0
    %976 = vmatpush.bf16.msra.mxu0 0
    %977 = vmatpush.bf16.msra.mxu0 0
    %978 = vmatpush.bf16.msra.mxu0 0
    %979 = vmatpush.bf16.msra.mxu0 %v967
    %980 = vmatpush.bf16.msra.mxu0 %v966
    %981 = vmatmul.bf16.gmra.mxu0 %v971
    %v982 = vpop.f32.mrf.mxu0
    %v983 = vadd.f32 0.0, %v982
    %v984 = vpop.f32.mrf.mxu0
    %985 = vdwg.mxu0
    %s986 = scalar_lea.vmem %s3, 28
    %v987 = vld [vmem:[%s986] sm:$0x3]
    %v988 = vsel %vm30, %v983, 0.0
    %v989 = vrot.slane %v988, 4
    %v990 = vadd.f32 %v988, %v989
    %v991 = vrot.slane %v990, 2
    %v992 = vadd.f32 %v990, %v991
    %v993 = vrot.slane %v992, 1
    %v994 = vadd.f32 %v992, %v993
    %v995 = vmul.f32 %v994, 0.125
    %v996 = vsub.f32 %v983, %v995
    %v997 = vmul.f32 %v996, %v996
    %v998 = vsel %vm30, %v997, 0.0
    %v999 = vrot.slane %v998, 4
    %v1000 = vadd.f32 %v998, %v999
    %v1001 = vrot.slane %v1000, 2
    %v1002 = vadd.f32 %v1000, %v1001
    %v1003 = vrot.slane %v1002, 1
    %v1004 = vadd.f32 %v1002, %v1003
    %v1005 = vmul.f32 %v1004, 0.125
    %v1006 = vadd.f32 %v1005, 1e-05
    %v1007 = vrsqrt.pop %v1006
    %v1008 = vmul.f32 %v1007, %v1006
    %v1009 = vmul.f32 %v1008, %v1007
    %v1010 = vmul.f32 0.5, %v1009
    %v1011 = vsub.f32 1.5, %v1010
    %v1012 = vmul.f32 %v1007, %v1011
    %vm1013 = vweird.f32 %v1006
    %vm1014 = vweird.f32 %v1007
    %vm1015 = vmor %vm1013, %vm1014
    %v1016 = vsel %vm1015, %v1007, %v1012
    %v1017 = vmul.f32 %v987, %v1016
    %v1018 = vperm.slane %v1017, 0
    %v1019 = vmul.f32 %v996, %v1018
    %v1020 = vperm.slane %v987, 1
    %v1021 = vadd.f32 %v1019, %v1020
    %v1022 = vmax.f32 %v1021, 0.0
    %v1023 = vpack.c.bf16 %v1022, %v1022
    %s1024 = scalar_lea.vmem %s2, 224
    %v1025 = vld [vmem:[%s1024] sm:$0xf]
    %v1026 = vld [vmem:[%s1024 + $0x4] sm:$0xf]
    %v1027 = vld [vmem:[%s1024 + $0x8] sm:$0xf]
    %v1028 = vld [vmem:[%s1024 + $0xc] sm:$0xf]
    %v1033 = vunpack.c.l.b16 %v1025
    %v1034 = vunpack.c.l.b16 %v1026
    %v1035 = vunpack.c.l.b16 %v1027
    %v1036 = vunpack.c.l.b16 %v1028
    %v1037 = vpack.c.b16 %v1034, %v1033
    %v1038 = vpack.c.b16 %v1036, %v1035
    %v1042 = vsel %vm30, %v1023, 0
    %1044 = vmatpush.bf16.msra.mxu0 0
    %1045 = vmatpush.bf16.msra.mxu0 0
    %1046 = vmatpush.bf16.msra.mxu0 0
    %1047 = vmatpush.bf16.msra.mxu0 0
    %1048 = vmatpush.bf16.msra.mxu0 0
    %1049 = vmatpush.bf16.msra.mxu0 0
    %1050 = vmatpush.bf16.msra.mxu0 %v1038
    %1051 = vmatpush.bf16.msra.mxu0 %v1037
    %1052 = vmatmul.bf16.gmra.mxu0 %v1042
    %v1053 = vpop.f32.mrf.mxu0
    %v1054 = vadd.f32 0.0, %v1053
    %v1055 = vpop.f32.mrf.mxu0
    %1056 = vdwg.mxu0
    %s1057 = scalar_lea.vmem %s3, 30
    %v1058 = vld [vmem:[%s1057] sm:$0x3]
    %v1059 = vsel %vm30, %v1054, 0.0
    %v1060 = vrot.slane %v1059, 4
    %v1061 = vadd.f32 %v1059, %v1060
    %v1062 = vrot.slane %v1061, 2
    %v1063 = vadd.f32 %v1061, %v1062
    %v1064 = vrot.slane %v1063, 1
    %v1065 = vadd.f32 %v1063, %v1064
    %v1066 = vmul.f32 %v1065, 0.125
    %v1067 = vsub.f32 %v1054, %v1066
    %v1068 = vmul.f32 %v1067, %v1067
    %v1069 = vsel %vm30, %v1068, 0.0
    %v1070 = vrot.slane %v1069, 4
    %v1071 = vadd.f32 %v1069, %v1070
    %v1072 = vrot.slane %v1071, 2
    %v1073 = vadd.f32 %v1071, %v1072
    %v1074 = vrot.slane %v1073, 1
    %v1075 = vadd.f32 %v1073, %v1074
    %v1076 = vmul.f32 %v1075, 0.125
    %v1077 = vadd.f32 %v1076, 1e-05
    %v1078 = vrsqrt.pop %v1077
    %v1079 = vmul.f32 %v1078, %v1077
    %v1080 = vmul.f32 %v1079, %v1078
    %v1081 = vmul.f32 0.5, %v1080
    %v1082 = vsub.f32 1.5, %v1081
    %v1083 = vmul.f32 %v1078, %v1082
    %vm1084 = vweird.f32 %v1077
    %vm1085 = vweird.f32 %v1078
    %vm1086 = vmor %vm1084, %vm1085
    %v1087 = vsel %vm1086, %v1078, %v1083
    %v1088 = vmul.f32 %v1058, %v1087
    %v1089 = vperm.slane %v1088, 0
    %v1090 = vmul.f32 %v1067, %v1089
    %v1091 = vperm.slane %v1058, 1
    %v1092 = vadd.f32 %v1090, %v1091
    %v1093 = vmax.f32 %v1092, 0.0
    %v1094 = vpack.c.bf16 %v1093, %v1093
    %s1095 = scalar_lea.vmem %s2, 240
    %v1096 = vld [vmem:[%s1095] sm:$0xf]
    %v1097 = vld [vmem:[%s1095 + $0x4] sm:$0xf]
    %v1098 = vld [vmem:[%s1095 + $0x8] sm:$0xf]
    %v1099 = vld [vmem:[%s1095 + $0xc] sm:$0xf]
    %v1104 = vunpack.c.l.b16 %v1096
    %v1105 = vunpack.c.l.b16 %v1097
    %v1106 = vunpack.c.l.b16 %v1098
    %v1107 = vunpack.c.l.b16 %v1099
    %v1108 = vpack.c.b16 %v1105, %v1104
    %v1109 = vpack.c.b16 %v1107, %v1106
    %v1113 = vsel %vm30, %v1094, 0
    %1115 = vmatpush.bf16.msra.mxu0 0
    %1116 = vmatpush.bf16.msra.mxu0 0
    %1117 = vmatpush.bf16.msra.mxu0 0
    %1118 = vmatpush.bf16.msra.mxu0 0
    %1119 = vmatpush.bf16.msra.mxu0 0
    %1120 = vmatpush.bf16.msra.mxu0 0
    %1121 = vmatpush.bf16.msra.mxu0 %v1109
    %1122 = vmatpush.bf16.msra.mxu0 %v1108
    %1123 = vmatmul.bf16.gmra.mxu0 %v1113
    %v1124 = vpop.f32.mrf.mxu0
    %v1125 = vadd.f32 0.0, %v1124
    %v1126 = vpop.f32.mrf.mxu0
    %1127 = vdwg.mxu0
    %s1128 = scalar_lea.vmem %s3, 32
    %v1129 = vld [vmem:[%s1128] sm:$0x3]
    %v1130 = vsel %vm30, %v1125, 0.0
    %v1131 = vrot.slane %v1130, 4
    %v1132 = vadd.f32 %v1130, %v1131
    %v1133 = vrot.slane %v1132, 2
    %v1134 = vadd.f32 %v1132, %v1133
    %v1135 = vrot.slane %v1134, 1
    %v1136 = vadd.f32 %v1134, %v1135
    %v1137 = vmul.f32 %v1136, 0.125
    %v1138 = vsub.f32 %v1125, %v1137
    %v1139 = vmul.f32 %v1138, %v1138
    %v1140 = vsel %vm30, %v1139, 0.0
    %v1141 = vrot.slane %v1140, 4
    %v1142 = vadd.f32 %v1140, %v1141
    %v1143 = vrot.slane %v1142, 2
    %v1144 = vadd.f32 %v1142, %v1143
    %v1145 = vrot.slane %v1144, 1
    %v1146 = vadd.f32 %v1144, %v1145
    %v1147 = vmul.f32 %v1146, 0.125
    %v1148 = vadd.f32 %v1147, 1e-05
    %v1149 = vrsqrt.pop %v1148
    %v1150 = vmul.f32 %v1149, %v1148
    %v1151 = vmul.f32 %v1150, %v1149
    %v1152 = vmul.f32 0.5, %v1151
    %v1153 = vsub.f32 1.5, %v1152
    %v1154 = vmul.f32 %v1149, %v1153
    %vm1155 = vweird.f32 %v1148
    %vm1156 = vweird.f32 %v1149
    %vm1157 = vmor %vm1155, %vm1156
    %v1158 = vsel %vm1157, %v1149, %v1154
    %v1159 = vmul.f32 %v1129, %v1158
    %v1160 = vperm.slane %v1159, 0
    %v1161 = vmul.f32 %v1138, %v1160
    %v1162 = vperm.slane %v1129, 1
    %v1163 = vadd.f32 %v1161, %v1162
    %v1164 = vmax.f32 %v1163, 0.0
    %v1165 = vpack.c.bf16 %v1164, %v1164
    %s1166 = scalar_lea.vmem %s2, 256
    %v1167 = vld [vmem:[%s1166] sm:$0xf]
    %v1168 = vld [vmem:[%s1166 + $0x4] sm:$0xf]
    %v1169 = vld [vmem:[%s1166 + $0x8] sm:$0xf]
    %v1170 = vld [vmem:[%s1166 + $0xc] sm:$0xf]
    %v1175 = vunpack.c.l.b16 %v1167
    %v1176 = vunpack.c.l.b16 %v1168
    %v1177 = vunpack.c.l.b16 %v1169
    %v1178 = vunpack.c.l.b16 %v1170
    %v1179 = vpack.c.b16 %v1176, %v1175
    %v1180 = vpack.c.b16 %v1178, %v1177
    %v1184 = vsel %vm30, %v1165, 0
    %1186 = vmatpush.bf16.msra.mxu0 0
    %1187 = vmatpush.bf16.msra.mxu0 0
    %1188 = vmatpush.bf16.msra.mxu0 0
    %1189 = vmatpush.bf16.msra.mxu0 0
    %1190 = vmatpush.bf16.msra.mxu0 0
    %1191 = vmatpush.bf16.msra.mxu0 0
    %1192 = vmatpush.bf16.msra.mxu0 %v1180
    %1193 = vmatpush.bf16.msra.mxu0 %v1179
    %1194 = vmatmul.bf16.gmra.mxu0 %v1184
    %v1195 = vpop.f32.mrf.mxu0
    %v1196 = vadd.f32 0.0, %v1195
    %v1197 = vpop.f32.mrf.mxu0
    %1198 = vdwg.mxu0
    %s1199 = scalar_lea.vmem %s3, 34
    %v1200 = vld [vmem:[%s1199] sm:$0x3]
    %v1201 = vsel %vm30, %v1196, 0.0
    %v1202 = vrot.slane %v1201, 4
    %v1203 = vadd.f32 %v1201, %v1202
    %v1204 = vrot.slane %v1203, 2
    %v1205 = vadd.f32 %v1203, %v1204
    %v1206 = vrot.slane %v1205, 1
    %v1207 = vadd.f32 %v1205, %v1206
    %v1208 = vmul.f32 %v1207, 0.125
    %v1209 = vsub.f32 %v1196, %v1208
    %v1210 = vmul.f32 %v1209, %v1209
    %v1211 = vsel %vm30, %v1210, 0.0
    %v1212 = vrot.slane %v1211, 4
    %v1213 = vadd.f32 %v1211, %v1212
    %v1214 = vrot.slane %v1213, 2
    %v1215 = vadd.f32 %v1213, %v1214
    %v1216 = vrot.slane %v1215, 1
    %v1217 = vadd.f32 %v1215, %v1216
    %v1218 = vmul.f32 %v1217, 0.125
    %v1219 = vadd.f32 %v1218, 1e-05
    %v1220 = vrsqrt.pop %v1219
    %v1221 = vmul.f32 %v1220, %v1219
    %v1222 = vmul.f32 %v1221, %v1220
    %v1223 = vmul.f32 0.5, %v1222
    %v1224 = vsub.f32 1.5, %v1223
    %v1225 = vmul.f32 %v1220, %v1224
    %vm1226 = vweird.f32 %v1219
    %vm1227 = vweird.f32 %v1220
    %vm1228 = vmor %vm1226, %vm1227
    %v1229 = vsel %vm1228, %v1220, %v1225
    %v1230 = vmul.f32 %v1200, %v1229
    %v1231 = vperm.slane %v1230, 0
    %v1232 = vmul.f32 %v1209, %v1231
    %v1233 = vperm.slane %v1200, 1
    %v1234 = vadd.f32 %v1232, %v1233
    %v1235 = vmax.f32 %v1234, 0.0
    %1236 = vst.msk [vmem:[#allocation2] sm:$0xff] %vm30, %v1235
    // Predicated region
    $region18: #{context_layer_forward.1} parent=1 // pred_check
      _
    $region19: #{context_layer_forward.1} parent=1 // pred_check_branch
      %1238 = sbr.rel (0) target = $region21
    $region20: #{context_layer_forward.1} parent=1 // pred_region
      %1240 = vsyncadd [#allocation3], 0
      %s1242 = sshll.u32 [#allocation2], 4
      %s1243 = int_to_ptr.vmem [resolvable:$true] %s1242
      %s1244 = sshll.u32 %s4, 4
      %s1245 = int_to_ptr.hbm [resolvable:$true] %s1244
      %1247 = dma.vmem_to_hbm [thread:$0]  %s1243, 128, %s1245, [#allocation3]
    $region21: #{context_layer_forward.1} parent=1 // pred_fallthru
      _
    // Predicated region
    $region22: #{context_layer_forward.1} parent=1 // pred_check
      _
    $region23: #{context_layer_forward.1} parent=1 // pred_check_branch
      %1249 = sbr.rel (0) target = $region25
    $region24: #{context_layer_forward.1} parent=1 // pred_region
      %1251 = dma.done [#allocation3], 128
    $region25: #{context_layer_forward.1} parent=1 // pred_fallthru
      _
    %1252 = vsyncpa [#allocation3], 1

</llo_original>
